<compile_context>
chip_gen: v5e
topology: v5e:2x2
jax: 0.10.0
libtpu: 0.0.40
codegen_flags: <defaults>
</compile_context>

<pallas_src>
import functools
import math

import jax
import jax.numpy as jnp
from jax.experimental import pallas as pl
from jax.experimental.pallas import tpu as pltpu


# ----------------------------------------------------------------------------
# Hardware-aware limits & tiling helpers
# ----------------------------------------------------------------------------

def _vmem_limit_bytes():
    """~3/4 of per-core VMEM, capped at 96 MiB (=> ~96 MiB on v5e/v6e's
    128 MiB, ~48 MiB on v7x's 64 MiB).  Falls back conservatively."""
    cap = 64 * 1024 * 1024
    try:
        info = pltpu.get_tpu_info()
        cap = int(getattr(info, "vmem_capacity_bytes", cap))
    except Exception:
        pass
    return int(min(cap * 3 // 4, 96 * 1024 * 1024))


_VMEM_LIMIT = _vmem_limit_bytes()


def _pick_l_tile(L, channels):
    """Adaptive sequence tile: keep channels * tile ~0.5M elements (so late,
    small-H layers use bigger tiles), lane-dense (multiple of 256 when
    tiling), and always a divisor of L."""
    if L <= 512:
        return L
    budget = max(256, (1 << 19) // max(int(channels), 1))
    for t in (2048, 1024, 512, 256):
        if t <= budget and L % t == 0:
            return t
    for t in (2048, 1024, 512, 256):          # fallback: any lane-dense divisor
        if L % t == 0:
            return t
    # TODO(synk): pad L / use a masked tail for lengths with no 256-divisor.
    return L


# ----------------------------------------------------------------------------
# In-kernel helpers
# ----------------------------------------------------------------------------

def _layernorm_channels(x, gb_ref):
    """LayerNorm over the channel (sublane) axis of an (H, T) tile.
    gb packs gamma | beta as (H, 2).  Single-pass statistics in f32."""
    mu = jnp.mean(x, axis=0, keepdims=True)                    # (1, T)
    var = jnp.mean(x * x, axis=0, keepdims=True) - mu * mu     # (1, T)
    xn = (x - mu) * jax.lax.rsqrt(var + jnp.float32(1e-5))
    return xn * gb_ref[:, 0:1] + gb_ref[:, 1:2]


# ----------------------------------------------------------------------------
# Pallas kernels
# ----------------------------------------------------------------------------

def _encoder_kernel(x_ref, w_ref, b_ref, gb_ref, x_out_ref, z_out_ref):
    # x: (1, T, d_in) bf16   w: (d_model, d_in) bf16   b: (d_model, 1) f32
    # w @ x^T computed directly (trans_b fused into the matmul) so the
    # channel-major output is written without a host-side transpose.
    xt = jax.lax.dot_general(
        w_ref[...], x_ref[0].astype(w_ref.dtype),
        (((1,), (1,)), ((), ())),
        preferred_element_type=jnp.float32) + b_ref[...]       # (d_model, T)
    x_out_ref[0] = xt
    z_out_ref[0] = _layernorm_channels(xt, gb_ref)             # layer-0 prenorm


def _ln_kernel(x_ref, gb_ref, z_ref):
    # Standalone prenorm LN (only used when d_model == d_input, no encoder).
    z_ref[0] = _layernorm_channels(x_ref[0], gb_ref)


def _post_core(pu_ref, px_ref, ow_ref, lw_ref, lb_ref):
    """Fused epilogue on the *pooled* stream.

    pu: (1, H, Tp) bf16  pooled gelu(S4 conv output)
    px: (1, H, Tp) f32   pooled pre-norm residual
    ow: (H, H)     bf16  S4 output 1x1-conv weight (bias folded into lb)
    lw: (H/2, H)   bf16  post-pool Linear weight
    lb: (H/2, 1)   f32   folded bias (= lw @ ob + lb; pool is linear)
    """
    v = jnp.dot(ow_ref[...], pu_ref[0],
                preferred_element_type=jnp.float32) + px_ref[0]   # (H, Tp)
    out = jnp.dot(lw_ref[...], v.astype(lw_ref.dtype),
                  preferred_element_type=jnp.float32) + lb_ref[...]
    # tanh GELU -> EUP slot, hidden under the matmuls (tiny delta vs erf).
    return jax.nn.gelu(out, approximate=True)                    # (H/2, Tp)


def _post_kernel(pu_ref, px_ref, ow_ref, lw_ref, lb_ref, o_ref):
    o_ref[0] = _post_core(pu_ref, px_ref, ow_ref, lw_ref, lb_ref)


def _post_ln_kernel(pu_ref, px_ref, ow_ref, lw_ref, lb_ref, gb_ref,
                    o_ref, z_ref):
    out = _post_core(pu_ref, px_ref, ow_ref, lw_ref, lb_ref)
    o_ref[0] = out
    z_ref[0] = _layernorm_channels(out, gb_ref)   # next layer's prenorm LN


def _decoder_kernel(x_ref, wT_ref, b_ref, o_ref):
    # x: (B, H, L) -> mean over L -> (B, H) -> Linear (bf16, f32 acc).
    m = jnp.mean(x_ref[...], axis=-1)
    o_ref[...] = jnp.dot(m.astype(wT_ref.dtype), wT_ref[...],
                         preferred_element_type=jnp.float32) + b_ref[...]


# ----------------------------------------------------------------------------
# Glue: causal depthwise S4 convolution (FFT, O(L log L)) + pooled branches
# ----------------------------------------------------------------------------

def _causal_conv_fft(z, kf, L):
    """y[b,h,l] = sum_{k<=l} K[h, l-k] * z[b,h,k]; kf = rfft(K, n=2L)."""
    n = 2 * L
    zf = jnp.fft.rfft(z, n=n, axis=-1)
    return jnp.fft.irfft(zf * kf[None, :, :], n=n, axis=-1)[..., :L]


# ----------------------------------------------------------------------------
# Wrappers around pallas_call
# ----------------------------------------------------------------------------

def encoder_forward(x, w, b, gb):
    """x: (B, L, d_in) bf16 -> (residual x, prenorm z), both (B, d_model, L)."""
    B, L, d_in = x.shape
    d_model = w.shape[0]
    t = _pick_l_tile(L, max(d_in, 2 * d_model))
    grid = (B, pl.cdiv(L, t))
    out_spec = pl.BlockSpec((1, d_model, t), lambda bi, j: (bi, 0, j))
    return pl.pallas_call(
        _encoder_kernel,
        out_shape=(jax.ShapeDtypeStruct((B, d_model, L), jnp.float32),
                   jax.ShapeDtypeStruct((B, d_model, L), jnp.float32)),
        grid_spec=pltpu.PrefetchScalarGridSpec(
            num_scalar_prefetch=0, grid=grid,
            in_specs=[
                pl.BlockSpec((1, t, d_in), lambda bi, j: (bi, j, 0)),
                pl.BlockSpec((d_model, d_in), lambda bi, j: (0, 0)),
                pl.BlockSpec((d_model, 1), lambda bi, j: (0, 0)),
                pl.BlockSpec((d_model, 2), lambda bi, j: (0, 0)),
            ],
            out_specs=[out_spec, out_spec]),
        compiler_params=pltpu.CompilerParams(
            dimension_semantics=("parallel", "parallel"),
            vmem_limit_bytes=_VMEM_LIMIT),
    )(x, w, b, gb)


def ln_forward(x, gb):
    """Standalone prenorm LN (no-encoder path).  x: (B, H, L) f32."""
    B, H, L = x.shape
    t = _pick_l_tile(L, H)
    grid = (B, pl.cdiv(L, t))
    spec = pl.BlockSpec((1, H, t), lambda b, j: (b, 0, j))
    return pl.pallas_call(
        _ln_kernel,
        out_shape=jax.ShapeDtypeStruct((B, H, L), jnp.float32),
        grid_spec=pltpu.PrefetchScalarGridSpec(
            num_scalar_prefetch=0, grid=grid,
            in_specs=[spec, pl.BlockSpec((H, 2), lambda b, j: (0, 0))],
            out_specs=spec),
        compiler_params=pltpu.CompilerParams(
            dimension_semantics=("parallel", "parallel"),
            vmem_limit_bytes=_VMEM_LIMIT),
    )(x, gb)


def layer_forward(x, z, lp, gb_next):
    """One ViS4mer layer.  x, z: (B, H, L) f32 (residual, prenorm'd residual).
    Returns (x_out, z_out): (B, H//2, L//2); z_out is None for the last layer."""
    B, H, L = x.shape
    Lp = L // 2
    Ho = H // 2

    # causal depthwise S4 conv via precomputed rfft(K); D skip folded in K[:,0]
    kf = jax.lax.complex(lp["kf_re"], lp["kf_im"])
    y = _causal_conv_fft(z, kf, L)

    # GELU (exact erf, as nn.GELU) + AvgPool1d(2) of the conv branch, and
    # AvgPool1d(2) of the residual.  Pooling BEFORE the 1x1 out-linear is
    # exact (pool along L, out-linear along channels) and halves that matmul
    # plus the bytes streamed into the Pallas epilogue.  These are cheap
    # elementwise / strided ops XLA fuses with the FFT epilogue; Mosaic has no
    # robust lane-compaction primitive, so they live in the glue.
    u = jax.nn.gelu(y, approximate=False)
    pu = (0.5 * (u[..., 0:2 * Lp:2] + u[..., 1:2 * Lp:2])).astype(jnp.bfloat16)
    px = 0.5 * (x[..., 0:2 * Lp:2] + x[..., 1:2 * Lp:2])

    t = _pick_l_tile(Lp, H)
    grid = (B, pl.cdiv(Lp, t))
    in_spec = pl.BlockSpec((1, H, t), lambda b, j: (b, 0, j))
    out_spec = pl.BlockSpec((1, Ho, t), lambda b, j: (b, 0, j))
    in_specs = [
        in_spec,                                          # pu (bf16)
        in_spec,                                          # px (f32)
        pl.BlockSpec((H, H), lambda b, j: (0, 0)),        # ow (bf16)
        pl.BlockSpec((Ho, H), lambda b, j: (0, 0)),       # lw (bf16)
        pl.BlockSpec((Ho, 1), lambda b, j: (0, 0)),       # folded bias
    ]
    cparams = pltpu.CompilerParams(
        dimension_semantics=("parallel", "parallel"),
        vmem_limit_bytes=_VMEM_LIMIT)

    if gb_next is None:                                   # last layer: no LN
        out = pl.pallas_call(
            _post_kernel,
            out_shape=jax.ShapeDtypeStruct((B, Ho, Lp), jnp.float32),
            grid_spec=pltpu.PrefetchScalarGridSpec(
                num_scalar_prefetch=0, grid=grid,
                in_specs=in_specs, out_specs=out_spec),
            compiler_params=cparams,
        )(pu, px, lp["ow"], lp["lw"], lp["lb"])
        return out, None

    out, z_out = pl.pallas_call(
        _post_ln_kernel,
        out_shape=(jax.ShapeDtypeStruct((B, Ho, Lp), jnp.float32),
                   jax.ShapeDtypeStruct((B, Ho, Lp), jnp.float32)),
        grid_spec=pltpu.PrefetchScalarGridSpec(
            num_scalar_prefetch=0, grid=grid,
            in_specs=in_specs + [pl.BlockSpec((Ho, 2), lambda b, j: (0, 0))],
            out_specs=[out_spec, out_spec]),
        compiler_params=cparams,
    )(pu, px, lp["ow"], lp["lw"], lp["lb"], gb_next)
    return out, z_out


def decoder_forward(x, wT, b):
    """x: (B, H, L) -> mean over L -> Linear -> (B, d_out).  Tiny; one block."""
    B, H, L = x.shape
    d_out = wT.shape[1]
    vmem = pl.BlockSpec(memory_space=pltpu.MemorySpace.VMEM)
    return pl.pallas_call(
        _decoder_kernel,
        out_shape=jax.ShapeDtypeStruct((B, d_out), jnp.float32),
        in_specs=[vmem, vmem, vmem],
        out_specs=vmem,
        compiler_params=pltpu.CompilerParams(vmem_limit_bytes=_VMEM_LIMIT),
    )(x, wT, b)


def vis4mer_forward(x, params, *, d_input, d_model):
    """Full ViS4mer forward (prenorm=True, eval mode)."""
    layers = params["layers"]
    if d_model != d_input:
        enc_w, enc_b = params["encoder"]
        xr, z = encoder_forward(x.astype(jnp.bfloat16), enc_w, enc_b,
                                layers[0]["gb"])
    else:
        xr = jnp.transpose(x.astype(jnp.float32), (0, 2, 1))
        z = ln_forward(xr, layers[0]["gb"])
    n = len(layers)
    for i, lp in enumerate(layers):
        gb_next = layers[i + 1]["gb"] if i + 1 < n else None
        xr, z = layer_forward(xr, z, lp, gb_next)
    dec_wT, dec_b = params["decoder"]
    return decoder_forward(xr, dec_wT, dec_b)


# ----------------------------------------------------------------------------
# Deterministic parameter construction (plain JAX)
# ----------------------------------------------------------------------------

def _linear_init(key, out_f, in_f):
    bound = 1.0 / math.sqrt(in_f)
    kw, kb = jax.random.split(key)
    w = jax.random.uniform(kw, (out_f, in_f), jnp.float32, -bound, bound)
    b = jax.random.uniform(kb, (out_f,), jnp.float32, -bound, bound)
    return w, b


def _s4d_conv_kernel(key, H, L, N=16):
    """Simplified (real-arithmetic) S4D-style convolution kernel K: (H, L)."""
    k1, k2, k3 = jax.random.split(key, 3)
    log_dt = jax.random.uniform(k1, (H, 1), jnp.float32,
                                math.log(0.001), math.log(0.1))
    dt = jnp.exp(log_dt)                                        # (H, 1)
    a_re = -0.5 * dt                                            # (H, 1)
    a_im = math.pi * jnp.arange(N, dtype=jnp.float32)[None, :] * dt   # (H, N)
    Cr = jax.random.normal(k2, (H, N), jnp.float32)
    Ci = jax.random.normal(k3, (H, N), jnp.float32)
    l = jnp.arange(L, dtype=jnp.float32)[None, None, :]         # (1, 1, L)
    decay = jnp.exp(a_re[:, :, None] * l)                       # (H, 1, L)
    phase = a_im[:, :, None] * l                                # (H, N, L)
    modes = decay * (Cr[:, :, None] * jnp.cos(phase)
                     - Ci[:, :, None] * jnp.sin(phase))         # (H, N, L)
    K = 2.0 * dt * jnp.sum(modes, axis=1) / N                   # (H, L)
    return K.astype(jnp.float32)


def init_params(key, d_input, l_max, d_output, d_model, n_layers, d_state=16):
    keys = jax.random.split(key, 2 + n_layers)
    enc_w, enc_b = _linear_init(keys[0], d_model, d_input)
    params = {"encoder": (enc_w.astype(jnp.bfloat16),
                          enc_b.reshape(d_model, 1)),
              "layers": []}
    H, L = d_model, l_max
    for i in range(n_layers):
        kK, kD, kO, kL = jax.random.split(keys[2 + i], 4)
        K = _s4d_conv_kernel(kK, H, L, d_state)
        D = jax.random.normal(kD, (H,), jnp.float32)
        K = K.at[:, 0].add(D)                       # fold D skip into lag-0 tap
        kf = jnp.fft.rfft(K, n=2 * L, axis=-1)      # precompute rfft(K) once
        ow, ob = _linear_init(kO, H, H)             # S4 output 1x1 conv
        lw, lb = _linear_init(kL, H // 2, H)        # post-pool Linear
        lb_eff = lw @ ob + lb                       # fold ob through pool + lw
        params["layers"].append(dict(
            gb=jnp.stack([jnp.ones((H,), jnp.float32),
                          jnp.zeros((H,), jnp.float32)], axis=1),  # gamma|beta
            kf_re=jnp.real(kf).astype(jnp.float32),
            kf_im=jnp.imag(kf).astype(jnp.float32),
            ow=ow.astype(jnp.bfloat16),             # bf16 weights, f32 acc
            lw=lw.astype(jnp.bfloat16),
            lb=lb_eff.reshape(H // 2, 1),
        ))
        H //= 2
        L //= 2
    dec_w, dec_b = _linear_init(keys[1], d_output, H)
    params["decoder"] = (dec_w.T.astype(jnp.bfloat16),   # precomputed transpose
                         dec_b.reshape(1, d_output))
    return params


# ----------------------------------------------------------------------------
# Demo
# ----------------------------------------------------------------------------

if __name__ == "__main__":
    B, l_max, d_input = 2, 8, 16
    d_model, n_layers, d_output = 32, 2, 10

    key = jax.random.PRNGKey(0)
    kx, kp = jax.random.split(key)
    x = jax.random.normal(kx, (B, l_max, d_input), jnp.float32)
    params = init_params(kp, d_input, l_max, d_output, d_model, n_layers)

    fwd = jax.jit(functools.partial(vis4mer_forward,
                                    d_input=d_input, d_model=d_model))
    out = jax.block_until_ready(fwd(x, params))
    assert out.shape == (B, d_output), out.shape
    assert out.dtype == jnp.float32
    print("KERNEL_OK")
</pallas_src>

<mosaic_0001>
module attributes {stable_mosaic.version = 11 : i64} {
  func.func @_encoder_kernel(%arg0: i32, %arg1: i32, %arg2: memref<1x8x16xbf16, #tpu.memory_space<vmem>>, %arg3: memref<32x16xbf16, #tpu.memory_space<vmem>>, %arg4: memref<32x1xf32, #tpu.memory_space<vmem>>, %arg5: memref<32x2xf32, #tpu.memory_space<vmem>>, %arg6: memref<1x32x8xf32, #tpu.memory_space<vmem>>, %arg7: memref<1x32x8xf32, #tpu.memory_space<vmem>>) attributes {dimension_semantics = [#tpu.dimension_semantics<parallel>, #tpu.dimension_semantics<parallel>], iteration_bounds = array<i64: 2, 1>, scalar_prefetch = 0 : i64, scratch_operands = 0 : i64, tpu.core_type = #tpu.core_type<tc>, window_params = [{transform_indices = @transform_0, window_bounds = array<i64: 1, 8, 16>}, {pipeline_mode = #tpu.pipeline_mode<synchronous>, transform_indices = @transform_1, window_bounds = array<i64: 32, 16>}, {pipeline_mode = #tpu.pipeline_mode<synchronous>, transform_indices = @transform_2, window_bounds = array<i64: 32, 1>}, {pipeline_mode = #tpu.pipeline_mode<synchronous>, transform_indices = @transform_3, window_bounds = array<i64: 32, 2>}, {transform_indices = @transform_4, window_bounds = array<i64: 1, 32, 8>}, {transform_indices = @transform_5, window_bounds = array<i64: 1, 32, 8>}]} {
    %c0 = arith.constant 0 : index
    %c0_0 = arith.constant 0 : index
    %0 = vector.load %arg3[%c0, %c0_0] : memref<32x16xbf16, #tpu.memory_space<vmem>>, vector<32x16xbf16>
    %c0_1 = arith.constant 0 : index
    %c0_2 = arith.constant 0 : index
    %c0_3 = arith.constant 0 : index
    %1 = vector.load %arg2[%c0_1, %c0_2, %c0_3] : memref<1x8x16xbf16, #tpu.memory_space<vmem>>, vector<1x8x16xbf16>
    %2 = vector.shape_cast %1 : vector<1x8x16xbf16> to vector<8x16xbf16>
    %cst = arith.constant dense<0.000000e+00> : vector<32x8xf32>
    %3 = tpu.matmul %0, %2, %cst {dimension_numbers = #tpu.dot_dimension_numbers<[1], [1], [0], [0], [0, 0, 1, 0], [], []>} : vector<32x16xbf16>, vector<8x16xbf16>, vector<32x8xf32> -> vector<32x8xf32>
    %c0_4 = arith.constant 0 : index
    %c0_5 = arith.constant 0 : index
    %4 = vector.load %arg4[%c0_4, %c0_5] : memref<32x1xf32, #tpu.memory_space<vmem>>, vector<32x1xf32>
    %5 = vector.broadcast %4 : vector<32x1xf32> to vector<32x8xf32>
    %6 = arith.addf %3, %5 : vector<32x8xf32>
    %c0_6 = arith.constant 0 : index
    %c0_7 = arith.constant 0 : index
    %c0_8 = arith.constant 0 : index
    %7 = vector.load %arg6[%c0_6, %c0_7, %c0_8] : memref<1x32x8xf32, #tpu.memory_space<vmem>>, vector<1x32x8xf32>
    %8 = vector.shape_cast %7 : vector<1x32x8xf32> to vector<32x8xf32>
    %9 = vector.shape_cast %6 : vector<32x8xf32> to vector<1x32x8xf32>
    tpu.vector_store %arg6[%c0_6, %c0_7, %c0_8], %9 {strides = array<i32>} : memref<1x32x8xf32, #tpu.memory_space<vmem>>, vector<1x32x8xf32>,
    %cst_9 = arith.constant dense<0.000000e+00> : vector<8xf32>
    %10 = vector.multi_reduction <add>, %6, %cst_9 [0] : vector<32x8xf32> to vector<8xf32>
    %11 = vector.shape_cast %10 : vector<8xf32> to vector<1x8xf32>
    %cst_10 = arith.constant 3.200000e+01 : f32
    %12 = vector.broadcast %cst_10 : f32 to vector<1x8xf32>
    %13 = arith.divf %11, %12 : vector<1x8xf32>
    %14 = arith.mulf %6, %6 : vector<32x8xf32>
    %cst_11 = arith.constant dense<0.000000e+00> : vector<8xf32>
    %15 = vector.multi_reduction <add>, %14, %cst_11 [0] : vector<32x8xf32> to vector<8xf32>
    %16 = vector.shape_cast %15 : vector<8xf32> to vector<1x8xf32>
    %cst_12 = arith.constant 3.200000e+01 : f32
    %17 = vector.broadcast %cst_12 : f32 to vector<1x8xf32>
    %18 = arith.divf %16, %17 : vector<1x8xf32>
    %19 = arith.mulf %13, %13 : vector<1x8xf32>
    %20 = arith.subf %18, %19 : vector<1x8xf32>
    %21 = vector.broadcast %13 : vector<1x8xf32> to vector<32x8xf32>
    %22 = arith.subf %6, %21 : vector<32x8xf32>
    %cst_13 = arith.constant 9.99999974E-6 : f32
    %23 = vector.broadcast %cst_13 : f32 to vector<1x8xf32>
    %24 = arith.addf %20, %23 : vector<1x8xf32>
    %25 = math.rsqrt %24 : vector<1x8xf32>
    %26 = vector.broadcast %25 : vector<1x8xf32> to vector<32x8xf32>
    %27 = arith.mulf %22, %26 : vector<32x8xf32>
    %c0_14 = arith.constant 0 : index
    %c0_15 = arith.constant 0 : index
    %28 = vector.load %arg5[%c0_14, %c0_15] : memref<32x2xf32, #tpu.memory_space<vmem>>, vector<32x1xf32>
    %29 = vector.broadcast %28 : vector<32x1xf32> to vector<32x8xf32>
    %30 = arith.mulf %27, %29 : vector<32x8xf32>
    %c0_16 = arith.constant 0 : index
    %c1 = arith.constant 1 : index
    %31 = vector.load %arg5[%c0_16, %c1] : memref<32x2xf32, #tpu.memory_space<vmem>>, vector<32x1xf32>
    %32 = vector.broadcast %31 : vector<32x1xf32> to vector<32x8xf32>
    %33 = arith.addf %30, %32 : vector<32x8xf32>
    %c0_17 = arith.constant 0 : index
    %c0_18 = arith.constant 0 : index
    %c0_19 = arith.constant 0 : index
    %34 = vector.load %arg7[%c0_17, %c0_18, %c0_19] : memref<1x32x8xf32, #tpu.memory_space<vmem>>, vector<1x32x8xf32>
    %35 = vector.shape_cast %34 : vector<1x32x8xf32> to vector<32x8xf32>
    %36 = vector.shape_cast %33 : vector<32x8xf32> to vector<1x32x8xf32>
    tpu.vector_store %arg7[%c0_17, %c0_18, %c0_19], %36 {strides = array<i32>} : memref<1x32x8xf32, #tpu.memory_space<vmem>>, vector<1x32x8xf32>,
    return
  }
  func.func @transform_0(%arg0: i32, %arg1: i32) -> (i32, i32, i32) {
    %c0_i32 = arith.constant 0 : i32
    %c0_i32_0 = arith.constant 0 : i32
    return %arg0, %arg1, %c0_i32 : i32, i32, i32
  }
  func.func @transform_1(%arg0: i32, %arg1: i32) -> (i32, i32) {
    %c0_i32 = arith.constant 0 : i32
    %c0_i32_0 = arith.constant 0 : i32
    %c0_i32_1 = arith.constant 0 : i32
    return %c0_i32, %c0_i32_0 : i32, i32
  }
  func.func @transform_2(%arg0: i32, %arg1: i32) -> (i32, i32) {
    %c0_i32 = arith.constant 0 : i32
    %c0_i32_0 = arith.constant 0 : i32
    %c0_i32_1 = arith.constant 0 : i32
    return %c0_i32, %c0_i32_0 : i32, i32
  }
  func.func @transform_3(%arg0: i32, %arg1: i32) -> (i32, i32) {
    %c0_i32 = arith.constant 0 : i32
    %c0_i32_0 = arith.constant 0 : i32
    %c0_i32_1 = arith.constant 0 : i32
    return %c0_i32, %c0_i32_0 : i32, i32
  }
  func.func @transform_4(%arg0: i32, %arg1: i32) -> (i32, i32, i32) {
    %c0_i32 = arith.constant 0 : i32
    %c0_i32_0 = arith.constant 0 : i32
    return %arg0, %c0_i32, %arg1 : i32, i32, i32
  }
  func.func @transform_5(%arg0: i32, %arg1: i32) -> (i32, i32, i32) {
    %c0_i32 = arith.constant 0 : i32
    %c0_i32_0 = arith.constant 0 : i32
    return %arg0, %c0_i32, %arg1 : i32, i32, i32
  }
}

module attributes {stable_mosaic.version = 11 : i64} {
  func.func @_post_ln_kernel(%arg0: i32, %arg1: i32, %arg2: memref<1x32x4xbf16, #tpu.memory_space<vmem>>, %arg3: memref<1x32x4xf32, #tpu.memory_space<vmem>>, %arg4: memref<32x32xbf16, #tpu.memory_space<vmem>>, %arg5: memref<16x32xbf16, #tpu.memory_space<vmem>>, %arg6: memref<16x1xf32, #tpu.memory_space<vmem>>, %arg7: memref<16x2xf32, #tpu.memory_space<vmem>>, %arg8: memref<1x16x4xf32, #tpu.memory_space<vmem>>, %arg9: memref<1x16x4xf32, #tpu.memory_space<vmem>>) attributes {dimension_semantics = [#tpu.dimension_semantics<parallel>, #tpu.dimension_semantics<parallel>], iteration_bounds = array<i64: 2, 1>, scalar_prefetch = 0 : i64, scratch_operands = 0 : i64, tpu.core_type = #tpu.core_type<tc>, window_params = [{transform_indices = @transform_0, window_bounds = array<i64: 1, 32, 4>}, {transform_indices = @transform_1, window_bounds = array<i64: 1, 32, 4>}, {pipeline_mode = #tpu.pipeline_mode<synchronous>, transform_indices = @transform_2, window_bounds = array<i64: 32, 32>}, {pipeline_mode = #tpu.pipeline_mode<synchronous>, transform_indices = @transform_3, window_bounds = array<i64: 16, 32>}, {pipeline_mode = #tpu.pipeline_mode<synchronous>, transform_indices = @transform_4, window_bounds = array<i64: 16, 1>}, {pipeline_mode = #tpu.pipeline_mode<synchronous>, transform_indices = @transform_5, window_bounds = array<i64: 16, 2>}, {transform_indices = @transform_6, window_bounds = array<i64: 1, 16, 4>}, {transform_indices = @transform_7, window_bounds = array<i64: 1, 16, 4>}]} {
    %c0 = arith.constant 0 : index
    %c0_0 = arith.constant 0 : index
    %0 = vector.load %arg4[%c0, %c0_0] : memref<32x32xbf16, #tpu.memory_space<vmem>>, vector<32x32xbf16>
    %c0_1 = arith.constant 0 : index
    %c0_2 = arith.constant 0 : index
    %c0_3 = arith.constant 0 : index
    %1 = vector.load %arg2[%c0_1, %c0_2, %c0_3] : memref<1x32x4xbf16, #tpu.memory_space<vmem>>, vector<1x32x4xbf16>
    %2 = vector.shape_cast %1 : vector<1x32x4xbf16> to vector<32x4xbf16>
    %cst = arith.constant dense<0.000000e+00> : vector<32x4xf32>
    %3 = tpu.matmul %0, %2, %cst {dimension_numbers = #tpu.dot_dimension_numbers<[1], [0], [0], [1], [0, 0, 1, 1], [], []>} : vector<32x32xbf16>, vector<32x4xbf16>, vector<32x4xf32> -> vector<32x4xf32>
    %c0_4 = arith.constant 0 : index
    %c0_5 = arith.constant 0 : index
    %c0_6 = arith.constant 0 : index
    %4 = vector.load %arg3[%c0_4, %c0_5, %c0_6] : memref<1x32x4xf32, #tpu.memory_space<vmem>>, vector<1x32x4xf32>
    %5 = vector.shape_cast %4 : vector<1x32x4xf32> to vector<32x4xf32>
    %6 = arith.addf %3, %5 : vector<32x4xf32>
    %c0_7 = arith.constant 0 : index
    %c0_8 = arith.constant 0 : index
    %7 = vector.load %arg5[%c0_7, %c0_8] : memref<16x32xbf16, #tpu.memory_space<vmem>>, vector<16x32xbf16>
    %8 = arith.truncf %6 : vector<32x4xf32> to vector<32x4xbf16>
    %cst_9 = arith.constant dense<0.000000e+00> : vector<16x4xf32>
    %9 = tpu.matmul %7, %8, %cst_9 {dimension_numbers = #tpu.dot_dimension_numbers<[1], [0], [0], [1], [0, 0, 1, 1], [], []>} : vector<16x32xbf16>, vector<32x4xbf16>, vector<16x4xf32> -> vector<16x4xf32>
    %c0_10 = arith.constant 0 : index
    %c0_11 = arith.constant 0 : index
    %10 = vector.load %arg6[%c0_10, %c0_11] : memref<16x1xf32, #tpu.memory_space<vmem>>, vector<16x1xf32>
    %11 = vector.broadcast %10 : vector<16x1xf32> to vector<16x4xf32>
    %12 = arith.addf %9, %11 : vector<16x4xf32>
    %13 = arith.mulf %12, %12 : vector<16x4xf32>
    %14 = arith.mulf %12, %13 : vector<16x4xf32>
    %cst_12 = arith.constant 4.471500e-02 : f32
    %15 = vector.broadcast %cst_12 : f32 to vector<16x4xf32>
    %16 = arith.mulf %15, %14 : vector<16x4xf32>
    %17 = arith.addf %12, %16 : vector<16x4xf32>
    %cst_13 = arith.constant 0.797884583 : f32
    %18 = vector.broadcast %cst_13 : f32 to vector<16x4xf32>
    %19 = arith.mulf %18, %17 : vector<16x4xf32>
    %20 = math.tanh %19 : vector<16x4xf32>
    %cst_14 = arith.constant 1.000000e+00 : f32
    %21 = vector.broadcast %cst_14 : f32 to vector<16x4xf32>
    %22 = arith.addf %21, %20 : vector<16x4xf32>
    %cst_15 = arith.constant 5.000000e-01 : f32
    %23 = vector.broadcast %cst_15 : f32 to vector<16x4xf32>
    %24 = arith.mulf %23, %22 : vector<16x4xf32>
    %25 = arith.mulf %12, %24 : vector<16x4xf32>
    %c0_16 = arith.constant 0 : index
    %c0_17 = arith.constant 0 : index
    %c0_18 = arith.constant 0 : index
    %26 = vector.load %arg8[%c0_16, %c0_17, %c0_18] : memref<1x16x4xf32, #tpu.memory_space<vmem>>, vector<1x16x4xf32>
    %27 = vector.shape_cast %26 : vector<1x16x4xf32> to vector<16x4xf32>
    %28 = vector.shape_cast %25 : vector<16x4xf32> to vector<1x16x4xf32>
    tpu.vector_store %arg8[%c0_16, %c0_17, %c0_18], %28 {strides = array<i32>} : memref<1x16x4xf32, #tpu.memory_space<vmem>>, vector<1x16x4xf32>,
    %cst_19 = arith.constant dense<0.000000e+00> : vector<4xf32>
    %29 = vector.multi_reduction <add>, %25, %cst_19 [0] : vector<16x4xf32> to vector<4xf32>
    %30 = vector.shape_cast %29 : vector<4xf32> to vector<1x4xf32>
    %cst_20 = arith.constant 1.600000e+01 : f32
    %31 = vector.broadcast %cst_20 : f32 to vector<1x4xf32>
    %32 = arith.divf %30, %31 : vector<1x4xf32>
    %33 = arith.mulf %25, %25 : vector<16x4xf32>
    %cst_21 = arith.constant dense<0.000000e+00> : vector<4xf32>
    %34 = vector.multi_reduction <add>, %33, %cst_21 [0] : vector<16x4xf32> to vector<4xf32>
    %35 = vector.shape_cast %34 : vector<4xf32> to vector<1x4xf32>
    %cst_22 = arith.constant 1.600000e+01 : f32
    %36 = vector.broadcast %cst_22 : f32 to vector<1x4xf32>
    %37 = arith.divf %35, %36 : vector<1x4xf32>
    %38 = arith.mulf %32, %32 : vector<1x4xf32>
    %39 = arith.subf %37, %38 : vector<1x4xf32>
    %40 = vector.broadcast %32 : vector<1x4xf32> to vector<16x4xf32>
    %41 = arith.subf %25, %40 : vector<16x4xf32>
    %cst_23 = arith.constant 9.99999974E-6 : f32
    %42 = vector.broadcast %cst_23 : f32 to vector<1x4xf32>
    %43 = arith.addf %39, %42 : vector<1x4xf32>
    %44 = math.rsqrt %43 : vector<1x4xf32>
    %45 = vector.broadcast %44 : vector<1x4xf32> to vector<16x4xf32>
    %46 = arith.mulf %41, %45 : vector<16x4xf32>
    %c0_24 = arith.constant 0 : index
    %c0_25 = arith.constant 0 : index
    %47 = vector.load %arg7[%c0_24, %c0_25] : memref<16x2xf32, #tpu.memory_space<vmem>>, vector<16x1xf32>
    %48 = vector.broadcast %47 : vector<16x1xf32> to vector<16x4xf32>
    %49 = arith.mulf %46, %48 : vector<16x4xf32>
    %c0_26 = arith.constant 0 : index
    %c1 = arith.constant 1 : index
    %50 = vector.load %arg7[%c0_26, %c1] : memref<16x2xf32, #tpu.memory_space<vmem>>, vector<16x1xf32>
    %51 = vector.broadcast %50 : vector<16x1xf32> to vector<16x4xf32>
    %52 = arith.addf %49, %51 : vector<16x4xf32>
    %c0_27 = arith.constant 0 : index
    %c0_28 = arith.constant 0 : index
    %c0_29 = arith.constant 0 : index
    %53 = vector.load %arg9[%c0_27, %c0_28, %c0_29] : memref<1x16x4xf32, #tpu.memory_space<vmem>>, vector<1x16x4xf32>
    %54 = vector.shape_cast %53 : vector<1x16x4xf32> to vector<16x4xf32>
    %55 = vector.shape_cast %52 : vector<16x4xf32> to vector<1x16x4xf32>
    tpu.vector_store %arg9[%c0_27, %c0_28, %c0_29], %55 {strides = array<i32>} : memref<1x16x4xf32, #tpu.memory_space<vmem>>, vector<1x16x4xf32>,
    return
  }
  func.func @transform_0(%arg0: i32, %arg1: i32) -> (i32, i32, i32) {
    %c0_i32 = arith.constant 0 : i32
    %c0_i32_0 = arith.constant 0 : i32
    return %arg0, %c0_i32, %arg1 : i32, i32, i32
  }
  func.func @transform_1(%arg0: i32, %arg1: i32) -> (i32, i32, i32) {
    %c0_i32 = arith.constant 0 : i32
    %c0_i32_0 = arith.constant 0 : i32
    return %arg0, %c0_i32, %arg1 : i32, i32, i32
  }
  func.func @transform_2(%arg0: i32, %arg1: i32) -> (i32, i32) {
    %c0_i32 = arith.constant 0 : i32
    %c0_i32_0 = arith.constant 0 : i32
    %c0_i32_1 = arith.constant 0 : i32
    return %c0_i32, %c0_i32_0 : i32, i32
  }
  func.func @transform_3(%arg0: i32, %arg1: i32) -> (i32, i32) {
    %c0_i32 = arith.constant 0 : i32
    %c0_i32_0 = arith.constant 0 : i32
    %c0_i32_1 = arith.constant 0 : i32
    return %c0_i32, %c0_i32_0 : i32, i32
  }
  func.func @transform_4(%arg0: i32, %arg1: i32) -> (i32, i32) {
    %c0_i32 = arith.constant 0 : i32
    %c0_i32_0 = arith.constant 0 : i32
    %c0_i32_1 = arith.constant 0 : i32
    return %c0_i32, %c0_i32_0 : i32, i32
  }
  func.func @transform_5(%arg0: i32, %arg1: i32) -> (i32, i32) {
    %c0_i32 = arith.constant 0 : i32
    %c0_i32_0 = arith.constant 0 : i32
    %c0_i32_1 = arith.constant 0 : i32
    return %c0_i32, %c0_i32_0 : i32, i32
  }
  func.func @transform_6(%arg0: i32, %arg1: i32) -> (i32, i32, i32) {
    %c0_i32 = arith.constant 0 : i32
    %c0_i32_0 = arith.constant 0 : i32
    return %arg0, %c0_i32, %arg1 : i32, i32, i32
  }
  func.func @transform_7(%arg0: i32, %arg1: i32) -> (i32, i32, i32) {
    %c0_i32 = arith.constant 0 : i32
    %c0_i32_0 = arith.constant 0 : i32
    return %arg0, %c0_i32, %arg1 : i32, i32, i32
  }
}

module attributes {stable_mosaic.version = 11 : i64} {
  func.func @_decoder_kernel(%arg0: memref<2x8x2xf32, #tpu.memory_space<vmem>>, %arg1: memref<8x10xbf16, #tpu.memory_space<vmem>>, %arg2: memref<1x10xf32, #tpu.memory_space<vmem>>, %arg3: memref<2x10xf32, #tpu.memory_space<vmem>>) attributes {dimension_semantics = [], scalar_prefetch = 0 : i64, scratch_operands = 0 : i64, tpu.core_type = #tpu.core_type<tc>} {
    %c0 = arith.constant 0 : index
    %c0_0 = arith.constant 0 : index
    %c0_1 = arith.constant 0 : index
    %0 = vector.load %arg0[%c0, %c0_0, %c0_1] : memref<2x8x2xf32, #tpu.memory_space<vmem>>, vector<2x8x2xf32>
    %cst = arith.constant dense<0.000000e+00> : vector<2x8xf32>
    %1 = vector.multi_reduction <add>, %0, %cst [2] : vector<2x8x2xf32> to vector<2x8xf32>
    %cst_2 = arith.constant 2.000000e+00 : f32
    %2 = vector.broadcast %cst_2 : f32 to vector<2x8xf32>
    %3 = arith.divf %1, %2 : vector<2x8xf32>
    %4 = arith.truncf %3 : vector<2x8xf32> to vector<2x8xbf16>
    %c0_3 = arith.constant 0 : index
    %c0_4 = arith.constant 0 : index
    %5 = vector.load %arg1[%c0_3, %c0_4] : memref<8x10xbf16, #tpu.memory_space<vmem>>, vector<8x10xbf16>
    %cst_5 = arith.constant dense<0.000000e+00> : vector<2x10xf32>
    %6 = tpu.matmul %4, %5, %cst_5 {dimension_numbers = #tpu.dot_dimension_numbers<[1], [0], [0], [1], [0, 0, 1, 1], [], []>} : vector<2x8xbf16>, vector<8x10xbf16>, vector<2x10xf32> -> vector<2x10xf32>
    %c0_6 = arith.constant 0 : index
    %c0_7 = arith.constant 0 : index
    %7 = vector.load %arg2[%c0_6, %c0_7] : memref<1x10xf32, #tpu.memory_space<vmem>>, vector<1x10xf32>
    %8 = vector.broadcast %7 : vector<1x10xf32> to vector<2x10xf32>
    %9 = arith.addf %6, %8 : vector<2x10xf32>
    %c0_8 = arith.constant 0 : index
    %c0_9 = arith.constant 0 : index
    %10 = vector.load %arg3[%c0_8, %c0_9] : memref<2x10xf32, #tpu.memory_space<vmem>>, vector<2x10xf32>
    tpu.vector_store %arg3[%c0_8, %c0_9], %9 {strides = array<i32>} : memref<2x10xf32, #tpu.memory_space<vmem>>, vector<2x10xf32>,
    return
  }
}

module attributes {stable_mosaic.version = 11 : i64} {
  func.func @_post_kernel(%arg0: i32, %arg1: i32, %arg2: memref<1x16x2xbf16, #tpu.memory_space<vmem>>, %arg3: memref<1x16x2xf32, #tpu.memory_space<vmem>>, %arg4: memref<16x16xbf16, #tpu.memory_space<vmem>>, %arg5: memref<8x16xbf16, #tpu.memory_space<vmem>>, %arg6: memref<8x1xf32, #tpu.memory_space<vmem>>, %arg7: memref<1x8x2xf32, #tpu.memory_space<vmem>>) attributes {dimension_semantics = [#tpu.dimension_semantics<parallel>, #tpu.dimension_semantics<parallel>], iteration_bounds = array<i64: 2, 1>, scalar_prefetch = 0 : i64, scratch_operands = 0 : i64, tpu.core_type = #tpu.core_type<tc>, window_params = [{transform_indices = @transform_0, window_bounds = array<i64: 1, 16, 2>}, {transform_indices = @transform_1, window_bounds = array<i64: 1, 16, 2>}, {pipeline_mode = #tpu.pipeline_mode<synchronous>, transform_indices = @transform_2, window_bounds = array<i64: 16, 16>}, {pipeline_mode = #tpu.pipeline_mode<synchronous>, transform_indices = @transform_3, window_bounds = array<i64: 8, 16>}, {pipeline_mode = #tpu.pipeline_mode<synchronous>, transform_indices = @transform_4, window_bounds = array<i64: 8, 1>}, {transform_indices = @transform_5, window_bounds = array<i64: 1, 8, 2>}]} {
    %c0 = arith.constant 0 : index
    %c0_0 = arith.constant 0 : index
    %0 = vector.load %arg4[%c0, %c0_0] : memref<16x16xbf16, #tpu.memory_space<vmem>>, vector<16x16xbf16>
    %c0_1 = arith.constant 0 : index
    %c0_2 = arith.constant 0 : index
    %c0_3 = arith.constant 0 : index
    %1 = vector.load %arg2[%c0_1, %c0_2, %c0_3] : memref<1x16x2xbf16, #tpu.memory_space<vmem>>, vector<1x16x2xbf16>
    %2 = vector.shape_cast %1 : vector<1x16x2xbf16> to vector<16x2xbf16>
    %cst = arith.constant dense<0.000000e+00> : vector<16x2xf32>
    %3 = tpu.matmul %0, %2, %cst {dimension_numbers = #tpu.dot_dimension_numbers<[1], [0], [0], [1], [0, 0, 1, 1], [], []>} : vector<16x16xbf16>, vector<16x2xbf16>, vector<16x2xf32> -> vector<16x2xf32>
    %c0_4 = arith.constant 0 : index
    %c0_5 = arith.constant 0 : index
    %c0_6 = arith.constant 0 : index
    %4 = vector.load %arg3[%c0_4, %c0_5, %c0_6] : memref<1x16x2xf32, #tpu.memory_space<vmem>>, vector<1x16x2xf32>
    %5 = vector.shape_cast %4 : vector<1x16x2xf32> to vector<16x2xf32>
    %6 = arith.addf %3, %5 : vector<16x2xf32>
    %c0_7 = arith.constant 0 : index
    %c0_8 = arith.constant 0 : index
    %7 = vector.load %arg5[%c0_7, %c0_8] : memref<8x16xbf16, #tpu.memory_space<vmem>>, vector<8x16xbf16>
    %8 = arith.truncf %6 : vector<16x2xf32> to vector<16x2xbf16>
    %cst_9 = arith.constant dense<0.000000e+00> : vector<8x2xf32>
    %9 = tpu.matmul %7, %8, %cst_9 {dimension_numbers = #tpu.dot_dimension_numbers<[1], [0], [0], [1], [0, 0, 1, 1], [], []>} : vector<8x16xbf16>, vector<16x2xbf16>, vector<8x2xf32> -> vector<8x2xf32>
    %c0_10 = arith.constant 0 : index
    %c0_11 = arith.constant 0 : index
    %10 = vector.load %arg6[%c0_10, %c0_11] : memref<8x1xf32, #tpu.memory_space<vmem>>, vector<8x1xf32>
    %11 = vector.broadcast %10 : vector<8x1xf32> to vector<8x2xf32>
    %12 = arith.addf %9, %11 : vector<8x2xf32>
    %13 = arith.mulf %12, %12 : vector<8x2xf32>
    %14 = arith.mulf %12, %13 : vector<8x2xf32>
    %cst_12 = arith.constant 4.471500e-02 : f32
    %15 = vector.broadcast %cst_12 : f32 to vector<8x2xf32>
    %16 = arith.mulf %15, %14 : vector<8x2xf32>
    %17 = arith.addf %12, %16 : vector<8x2xf32>
    %cst_13 = arith.constant 0.797884583 : f32
    %18 = vector.broadcast %cst_13 : f32 to vector<8x2xf32>
    %19 = arith.mulf %18, %17 : vector<8x2xf32>
    %20 = math.tanh %19 : vector<8x2xf32>
    %cst_14 = arith.constant 1.000000e+00 : f32
    %21 = vector.broadcast %cst_14 : f32 to vector<8x2xf32>
    %22 = arith.addf %21, %20 : vector<8x2xf32>
    %cst_15 = arith.constant 5.000000e-01 : f32
    %23 = vector.broadcast %cst_15 : f32 to vector<8x2xf32>
    %24 = arith.mulf %23, %22 : vector<8x2xf32>
    %25 = arith.mulf %12, %24 : vector<8x2xf32>
    %c0_16 = arith.constant 0 : index
    %c0_17 = arith.constant 0 : index
    %c0_18 = arith.constant 0 : index
    %26 = vector.load %arg7[%c0_16, %c0_17, %c0_18] : memref<1x8x2xf32, #tpu.memory_space<vmem>>, vector<1x8x2xf32>
    %27 = vector.shape_cast %26 : vector<1x8x2xf32> to vector<8x2xf32>
    %28 = vector.shape_cast %25 : vector<8x2xf32> to vector<1x8x2xf32>
    tpu.vector_store %arg7[%c0_16, %c0_17, %c0_18], %28 {strides = array<i32>} : memref<1x8x2xf32, #tpu.memory_space<vmem>>, vector<1x8x2xf32>,
    return
  }
  func.func @transform_0(%arg0: i32, %arg1: i32) -> (i32, i32, i32) {
    %c0_i32 = arith.constant 0 : i32
    %c0_i32_0 = arith.constant 0 : i32
    return %arg0, %c0_i32, %arg1 : i32, i32, i32
  }
  func.func @transform_1(%arg0: i32, %arg1: i32) -> (i32, i32, i32) {
    %c0_i32 = arith.constant 0 : i32
    %c0_i32_0 = arith.constant 0 : i32
    return %arg0, %c0_i32, %arg1 : i32, i32, i32
  }
  func.func @transform_2(%arg0: i32, %arg1: i32) -> (i32, i32) {
    %c0_i32 = arith.constant 0 : i32
    %c0_i32_0 = arith.constant 0 : i32
    %c0_i32_1 = arith.constant 0 : i32
    return %c0_i32, %c0_i32_0 : i32, i32
  }
  func.func @transform_3(%arg0: i32, %arg1: i32) -> (i32, i32) {
    %c0_i32 = arith.constant 0 : i32
    %c0_i32_0 = arith.constant 0 : i32
    %c0_i32_1 = arith.constant 0 : i32
    return %c0_i32, %c0_i32_0 : i32, i32
  }
  func.func @transform_4(%arg0: i32, %arg1: i32) -> (i32, i32) {
    %c0_i32 = arith.constant 0 : i32
    %c0_i32_0 = arith.constant 0 : i32
    %c0_i32_1 = arith.constant 0 : i32
    return %c0_i32, %c0_i32_0 : i32, i32
  }
  func.func @transform_5(%arg0: i32, %arg1: i32) -> (i32, i32, i32) {
    %c0_i32 = arith.constant 0 : i32
    %c0_i32_0 = arith.constant 0 : i32
    return %arg0, %c0_i32, %arg1 : i32, i32, i32
  }
}

</mosaic_0001>

<llo_original>
// kernel: reverse.0
$region0: #{reverse.0}
  %s0 = inlined_call_operand.vmem [shape: f32[2,32,7], index: 0, kind: input, shape index: {}]
  %s1 = inlined_call_operand.vmem [shape: f32[2,32,7], index: 1, kind: output, shape index: {}]
  $region1: #{reverse.0} parent=0
    #allocation0 [shape = 'u8[16384]{0}', space=vmem, size = 0x4000, scoped, tag = 'operand span for operand 0']
    #allocation1 [shape = 'u8[8192]{0}', space=vmem, size = 0x2000, scoped, tag = 'operand span for operand 1']
    %s2 = scalar_lea.vmem [#allocation0], 8
    // Predicated region
    $region2: #{reverse.0} parent=1 // pred_check
      _
    $region3: #{reverse.0} parent=1 // pred_check_branch
      %4 = sbr.rel (0) target = $region5
    $region4: #{reverse.0} parent=1 // pred_region
      // Predicated region
      $region6: #{reverse.0} parent=4 // pred_check
        _
      $region7: #{reverse.0} parent=4 // pred_check_branch
        %6 = sbr.rel (0) target = $region9
      $region8: #{reverse.0} parent=4 // pred_region
        // Predicated region
        $region21: #{reverse.0} parent=8 // pred_check
          _
        $region22: #{reverse.0} parent=8 // pred_check_branch
          %24 = sbr.rel (0) target = $region24
        $region23: #{reverse.0} parent=8 // pred_region
          loop: start=0, step=1, limit=1
          $region25: #{reverse.0} parent=23 // loop_pre_header
            _
          $region26: #{reverse.0} parent=23 // loop_header
            %s26 = sphi 0, %s30
            %p27 = scmp.ge.s32.totalorder %s26, 1
            %s31 = sphi %s0, %s0
            %s32 = sphi %s2, %s2
          $region27: #{reverse.0} parent=23 // loop_header_branch
            %29 = sbr.rel (%p27) target = $region31
          $region28: #{reverse.0} parent=23 // loop_body
            %v33 = vld [vmem:[%s31] sm:$0xff]
            %34 = vst [vmem:[%s32] sm:$0xff] %v33
            %v35 = vld [vmem:[%s31 + $0x8] sm:$0xff]
            %36 = vst [vmem:[%s32 + $0x10] sm:$0xff] %v35
          $region29: #{reverse.0} parent=23 // loop_footer
            %s30 = sadd.s32 1, %s26
          $region30: #{reverse.0} parent=23 // loop_footer_branch
            %25 = sbr.rel target = $region26
          $region31: #{reverse.0} parent=23 // loop_exit
            _
        $region24: #{reverse.0} parent=8 // pred_fallthru
          _
        // Predicated region
        $region32: #{reverse.0} parent=8 // pred_check
          _
        $region33: #{reverse.0} parent=8 // pred_check_branch
          %38 = sbr.rel target = $region35
        $region34: #{reverse.0} parent=8 // pred_region
          _
        $region35: #{reverse.0} parent=8 // pred_fallthru
          _
      $region9: #{reverse.0} parent=4 // pred_fallthru
        _
      // Predicated region
      $region10: #{reverse.0} parent=4 // pred_check
        _
      $region11: #{reverse.0} parent=4 // pred_check_branch
        %8 = sbr.rel target = $region13
      $region12: #{reverse.0} parent=4 // pred_region
        %s10 = ssub.s32 256, 1
        loop: start=0, step=1, limit=1
        $region14: #{reverse.0} parent=12 // loop_pre_header
          _
        $region15: #{reverse.0} parent=12 // loop_header
          %s12 = sphi 0, %s16
          %p13 = scmp.ge.s32.totalorder %s12, 1
          %s17 = sphi %s0, %s0
          %s18 = sphi %s2, %s2
        $region16: #{reverse.0} parent=12 // loop_header_branch
          %15 = sbr.rel (%p13) target = $region20
        $region17: #{reverse.0} parent=12 // loop_body
          %v19 = vld [vmem:[%s17] sm:%s10]
          %20 = vst [vmem:[%s18] sm:%s10] %v19
          %v21 = vld [vmem:[%s17 + $0x8] sm:%s10]
          %22 = vst [vmem:[%s18 + $0x10] sm:%s10] %v21
        $region18: #{reverse.0} parent=12 // loop_footer
          %s16 = sadd.s32 1, %s12
        $region19: #{reverse.0} parent=12 // loop_footer_branch
          %11 = sbr.rel target = $region15
        $region20: #{reverse.0} parent=12 // loop_exit
          _
      $region13: #{reverse.0} parent=4 // pred_fallthru
        _
    $region5: #{reverse.0} parent=1 // pred_fallthru
      _
    %39 = vnop
    %s40 = scalar_lea.vmem [#allocation0], 7
    %v41 = vld [vmem:[%s40] ss:$-1 sm:$0xff]
    %v42 = vrot.slane %v41, 1
    %43 = vst [vmem:[#allocation1] sm:$0xff] %v42
    %s44 = scalar_lea.vmem [#allocation0], 8
    %s45 = scalar_lea.vmem %s44, 7 [#allocation0]
    %v46 = vld [vmem:[%s45] ss:$-1 sm:$0xff]
    %v47 = vrot.slane %v46, 1
    %v48 = vlaneseq
    %v49 = vshrl.u32 %v48, 7
    %vm50 = vcmp.lt.s32.totalorder %v49, 7
    %51 = vst.msk [vmem:[#allocation1] sm:$0xff] %vm50, %v47
    %s52 = scalar_lea.vmem [#allocation1], 8
    %s53 = scalar_lea.vmem [#allocation0], 16
    %s54 = scalar_lea.vmem %s53, 7 [#allocation0]
    %v55 = vld [vmem:[%s54] ss:$-1 sm:$0xff]
    %v56 = vrot.slane %v55, 1
    %57 = vst [vmem:[%s52] sm:$0xff] %v56
    %s58 = scalar_lea.vmem %s53, 8 [#allocation0]
    %s59 = scalar_lea.vmem %s58, 7 [#allocation0]
    %v60 = vld [vmem:[%s59] ss:$-1 sm:$0xff]
    %v61 = vrot.slane %v60, 1
    %v62 = vlaneseq
    %v63 = vshrl.u32 %v62, 7
    %vm64 = vcmp.lt.s32.totalorder %v63, 7
    %65 = vst.msk [vmem:[%s52] sm:$0xff] %vm64, %v61
    // Predicated region
    $region36: #{reverse.0} parent=1 // pred_check
      _
    $region37: #{reverse.0} parent=1 // pred_check_branch
      %67 = sbr.rel (0) target = $region39
    $region38: #{reverse.0} parent=1 // pred_region
      // Predicated region
      $region40: #{reverse.0} parent=38 // pred_check
        _
      $region41: #{reverse.0} parent=38 // pred_check_branch
        %69 = sbr.rel (0) target = $region43
      $region42: #{reverse.0} parent=38 // pred_region
        // Predicated region
        $region55: #{reverse.0} parent=42 // pred_check
          _
        $region56: #{reverse.0} parent=42 // pred_check_branch
          %87 = sbr.rel (0) target = $region58
        $region57: #{reverse.0} parent=42 // pred_region
          loop: start=0, step=1, limit=1
          $region59: #{reverse.0} parent=57 // loop_pre_header
            _
          $region60: #{reverse.0} parent=57 // loop_header
            %s89 = sphi 0, %s93
            %p90 = scmp.ge.s32.totalorder %s89, 1
            %s94 = sphi [#allocation1], [#allocation1]
            %s95 = sphi %s1, %s1
          $region61: #{reverse.0} parent=57 // loop_header_branch
            %92 = sbr.rel (%p90) target = $region65
          $region62: #{reverse.0} parent=57 // loop_body
            %v96 = vld [vmem:[%s94] sm:$0xff]
            %97 = vst [vmem:[%s95] sm:$0xff] %v96
            %v98 = vld [vmem:[%s94 + $0x8] sm:$0xff]
            %99 = vst [vmem:[%s95 + $0x8] sm:$0xff] %v98
          $region63: #{reverse.0} parent=57 // loop_footer
            %s93 = sadd.s32 1, %s89
          $region64: #{reverse.0} parent=57 // loop_footer_branch
            %88 = sbr.rel target = $region60
          $region65: #{reverse.0} parent=57 // loop_exit
            _
        $region58: #{reverse.0} parent=42 // pred_fallthru
          _
        // Predicated region
        $region66: #{reverse.0} parent=42 // pred_check
          _
        $region67: #{reverse.0} parent=42 // pred_check_branch
          %101 = sbr.rel target = $region69
        $region68: #{reverse.0} parent=42 // pred_region
          _
        $region69: #{reverse.0} parent=42 // pred_fallthru
          _
      $region43: #{reverse.0} parent=38 // pred_fallthru
        _
      // Predicated region
      $region44: #{reverse.0} parent=38 // pred_check
        _
      $region45: #{reverse.0} parent=38 // pred_check_branch
        %71 = sbr.rel target = $region47
      $region46: #{reverse.0} parent=38 // pred_region
        %s73 = ssub.s32 256, 1
        loop: start=0, step=1, limit=1
        $region48: #{reverse.0} parent=46 // loop_pre_header
          _
        $region49: #{reverse.0} parent=46 // loop_header
          %s75 = sphi 0, %s79
          %p76 = scmp.ge.s32.totalorder %s75, 1
          %s80 = sphi [#allocation1], [#allocation1]
          %s81 = sphi %s1, %s1
        $region50: #{reverse.0} parent=46 // loop_header_branch
          %78 = sbr.rel (%p76) target = $region54
        $region51: #{reverse.0} parent=46 // loop_body
          %v82 = vld [vmem:[%s80] sm:%s73]
          %83 = vst [vmem:[%s81] sm:%s73] %v82
          %v84 = vld [vmem:[%s80 + $0x8] sm:%s73]
          %85 = vst [vmem:[%s81 + $0x8] sm:%s73] %v84
        $region52: #{reverse.0} parent=46 // loop_footer
          %s79 = sadd.s32 1, %s75
        $region53: #{reverse.0} parent=46 // loop_footer_branch
          %74 = sbr.rel target = $region49
        $region54: #{reverse.0} parent=46 // loop_exit
          _
      $region47: #{reverse.0} parent=38 // pred_fallthru
        _
    $region39: #{reverse.0} parent=1 // pred_fallthru
      _
    %102 = vnop

// kernel: vis4mer_forward.4
$region0: #{vis4mer_forward.4}
  #allocation0 [shape = 'u32[]', space=smem, size = 0x4, offset = 0x4, fixed_abs, tag = 'smem constant byte address 0x4 - core index']
  #allocation1 [shape = 'u32[72,128]{1,0:T(1,128)}', space=vmem, size = 0x9000, scoped, tag = 'internal scratch']
  %s0 = inlined_call_operand.vmem [shape: bf16[2,8,16], index: 0, kind: input, shape index: {}]
  %s1 = inlined_call_operand.vmem [shape: bf16[32,16], index: 1, kind: input, shape index: {}]
  %s2 = inlined_call_operand.vmem [shape: f32[32,1], index: 2, kind: input, shape index: {}]
  %s3 = inlined_call_operand.vmem [shape: f32[32,2], index: 3, kind: input, shape index: {}]
  %s4 = inlined_call_operand.vmem [shape: f32[2,32,8], index: 4, kind: output, shape index: {0}]
  %s5 = inlined_call_operand.vmem [shape: f32[2,32,8], index: 5, kind: output, shape index: {1}]
  %6 = xla_tuple %s4, %s5
  %s7 = sld [smem:[#allocation0]]
  $region57: #{vis4mer_forward.4} parent=0
    _
  %s9 = ssub.s32 1, %s7
  %s10 = scalar_select 0, %s9, %s7
  loop: start=0, step=1, limit=4
  $region2: #{vis4mer_forward.4} parent=0 // loop_pre_header
    _
  $region3: #{vis4mer_forward.4} parent=0 // loop_header
    %s12 = sphi 0, %s16
    %p13 = scmp.ge.s32.totalorder %s12, 4
    %s19 = sphi 0, %s31
    %s20 = sphi 0, %s27
    %s21 = sphi 0, %s19
    %s22 = sphi 0, %s20
    %s23 = sphi 0, %s21
    %s24 = sphi 0, %s22
    %s36 = sphi 0, %s38
    %s39 = sphi 0, %s36
    %s40 = sphi 0, %s39
    %s56 = sphi 0, %s40
    %s60 = sphi 0, %s60
    %s62 = sphi 0, %s60
    %s63 = sphi 0, %s62
    %s77 = sphi 0, %s63
    %s81 = sphi 0, %s81
    %s83 = sphi 0, %s81
    %s84 = sphi 0, %s83
    %s98 = sphi 0, %s84
    %s102 = sphi 0, %s102
    %s104 = sphi 0, %s102
    %s105 = sphi 0, %s104
    %s119 = sphi 0, %s105
    %s127 = sphi 0, %s129
    %s130 = sphi 0, %s127
    %s131 = sphi 0, %s130
    %s147 = sphi 0, %s131
    %s155 = sphi 0, %s157
    %s158 = sphi 0, %s155
    %s159 = sphi 0, %s158
    %s175 = sphi 0, %s159
  $region4: #{vis4mer_forward.4} parent=0 // loop_header_branch
    %15 = sbr.rel (%p13) target = $region8
  $region5: #{vis4mer_forward.4} parent=0 // loop_body
    %s17 = ssub.s32 %s12, 1
    %s18 = ssub.s32 %s12, 2
    %s25 = sadd.s32 1, %s20
    %p26 = scmp.ge.s32.totalorder %s25, 1
    %s27 = scalar_select %p26, 0, %s25
    %s28 = sadd.s32 1, %s19
    %s29 = scalar_select %p26, %s28, %s19
    %p30 = scmp.ge.s32.totalorder %s29, 2
    %s31 = scalar_select %p30, 0, %s29
    %s32 = ssub.s32 %s19, %s31
    %s33 = ssub.s32 %s20, %s27
    %s34 = sor.u32 %s32, %s33
    %p35 = scmp.eq.s32.totalorder %s34, 0
    %s37 = sadd.s32 %s36, 1
    %s38 = scalar_select %p35, %s36, %s37
    %p41 = pneg %p35
    %p42 = scmp.eq.s32.totalorder %s12, 1
    %p43 = por %p41, %p42
    %p44 = scmp.ne.s32.totalorder %s36, %s39
    %p45 = scmp.eq.s32.totalorder %s12, 0
    %p46 = por %p44, %p45
    %p47 = scmp.ne.s32.totalorder %s36, %s39
    %p48 = scmp.eq.s32.totalorder %s17, 1
    %p49 = por %p47, %p48
    %p50 = scmp.ne.s32.totalorder %s39, %s40
    %p51 = scmp.eq.s32.totalorder %s17, 0
    %p52 = por %p50, %p51
    %p53 = scmp.ne.s32.totalorder %s39, %s40
    %p54 = scmp.eq.s32.totalorder %s18, 1
    %p55 = por %p53, %p54
    %p57 = scmp.ne.s32.totalorder %s40, %s56
    %p58 = scmp.eq.s32.totalorder %s18, 0
    %p59 = por %p57, %p58
    %s61 = sadd.s32 %s60, 1
    %p64 = scmp.eq.s32.totalorder %s12, 1
    %p65 = scmp.ne.s32.totalorder %s60, %s62
    %p66 = scmp.eq.s32.totalorder %s12, 0
    %p67 = por %p65, %p66
    %p68 = scmp.ne.s32.totalorder %s60, %s62
    %p69 = scmp.eq.s32.totalorder %s17, 1
    %p70 = por %p68, %p69
    %p71 = scmp.ne.s32.totalorder %s62, %s63
    %p72 = scmp.eq.s32.totalorder %s17, 0
    %p73 = por %p71, %p72
    %p74 = scmp.ne.s32.totalorder %s62, %s63
    %p75 = scmp.eq.s32.totalorder %s18, 1
    %p76 = por %p74, %p75
    %p78 = scmp.ne.s32.totalorder %s63, %s77
    %p79 = scmp.eq.s32.totalorder %s18, 0
    %p80 = por %p78, %p79
    %s82 = sadd.s32 %s81, 1
    %p85 = scmp.eq.s32.totalorder %s12, 1
    %p86 = scmp.ne.s32.totalorder %s81, %s83
    %p87 = scmp.eq.s32.totalorder %s12, 0
    %p88 = por %p86, %p87
    %p89 = scmp.ne.s32.totalorder %s81, %s83
    %p90 = scmp.eq.s32.totalorder %s17, 1
    %p91 = por %p89, %p90
    %p92 = scmp.ne.s32.totalorder %s83, %s84
    %p93 = scmp.eq.s32.totalorder %s17, 0
    %p94 = por %p92, %p93
    %p95 = scmp.ne.s32.totalorder %s83, %s84
    %p96 = scmp.eq.s32.totalorder %s18, 1
    %p97 = por %p95, %p96
    %p99 = scmp.ne.s32.totalorder %s84, %s98
    %p100 = scmp.eq.s32.totalorder %s18, 0
    %p101 = por %p99, %p100
    %s103 = sadd.s32 %s102, 1
    %p106 = scmp.eq.s32.totalorder %s12, 1
    %p107 = scmp.ne.s32.totalorder %s102, %s104
    %p108 = scmp.eq.s32.totalorder %s12, 0
    %p109 = por %p107, %p108
    %p110 = scmp.ne.s32.totalorder %s102, %s104
    %p111 = scmp.eq.s32.totalorder %s17, 1
    %p112 = por %p110, %p111
    %p113 = scmp.ne.s32.totalorder %s104, %s105
    %p114 = scmp.eq.s32.totalorder %s17, 0
    %p115 = por %p113, %p114
    %p116 = scmp.ne.s32.totalorder %s104, %s105
    %p117 = scmp.eq.s32.totalorder %s18, 1
    %p118 = por %p116, %p117
    %p120 = scmp.ne.s32.totalorder %s105, %s119
    %p121 = scmp.eq.s32.totalorder %s18, 0
    %p122 = por %p120, %p121
    %s123 = ssub.s32 %s19, %s31
    %s124 = ssub.s32 %s20, %s27
    %s125 = sor.u32 %s123, %s124
    %p126 = scmp.eq.s32.totalorder %s125, 0
    %s128 = sadd.s32 %s127, 1
    %s129 = scalar_select %p126, %s127, %s128
    %p132 = pneg %p126
    %p133 = scmp.eq.s32.totalorder %s12, 1
    %p134 = por %p132, %p133
    %p135 = scmp.ne.s32.totalorder %s127, %s130
    %p136 = scmp.eq.s32.totalorder %s12, 0
    %p137 = por %p135, %p136
    %p138 = scmp.ne.s32.totalorder %s127, %s130
    %p139 = scmp.eq.s32.totalorder %s17, 1
    %p140 = por %p138, %p139
    %p141 = scmp.ne.s32.totalorder %s130, %s131
    %p142 = scmp.eq.s32.totalorder %s17, 0
    %p143 = por %p141, %p142
    %p144 = scmp.ne.s32.totalorder %s130, %s131
    %p145 = scmp.eq.s32.totalorder %s18, 1
    %p146 = por %p144, %p145
    %p148 = scmp.ne.s32.totalorder %s131, %s147
    %p149 = scmp.eq.s32.totalorder %s18, 0
    %p150 = por %p148, %p149
    %s151 = ssub.s32 %s19, %s31
    %s152 = ssub.s32 %s20, %s27
    %s153 = sor.u32 %s151, %s152
    %p154 = scmp.eq.s32.totalorder %s153, 0
    %s156 = sadd.s32 %s155, 1
    %s157 = scalar_select %p154, %s155, %s156
    %p160 = pneg %p154
    %p161 = scmp.eq.s32.totalorder %s12, 1
    %p162 = por %p160, %p161
    %p163 = scmp.ne.s32.totalorder %s155, %s158
    %p164 = scmp.eq.s32.totalorder %s12, 0
    %p165 = por %p163, %p164
    %p166 = scmp.ne.s32.totalorder %s155, %s158
    %p167 = scmp.eq.s32.totalorder %s17, 1
    %p168 = por %p166, %p167
    %p169 = scmp.ne.s32.totalorder %s158, %s159
    %p170 = scmp.eq.s32.totalorder %s17, 0
    %p171 = por %p169, %p170
    %p172 = scmp.ne.s32.totalorder %s158, %s159
    %p173 = scmp.eq.s32.totalorder %s18, 1
    %p174 = por %p172, %p173
    %p176 = scmp.ne.s32.totalorder %s159, %s175
    %p177 = scmp.eq.s32.totalorder %s18, 0
    %p178 = por %p176, %p177
    %p179 = scmp.le.s32.totalorder 1, %s12
    %p180 = scmp.lt.s32.totalorder %s12, 3
    %p181 = pnand %p179, %p180
    %p182 = pneg %p181
    // Predicated region
    $region9: #{vis4mer_forward.4} parent=5 // pred_check
      _
    $region10: #{vis4mer_forward.4} parent=5 // pred_check_branch
      %184 = sbr.rel (%p181) target = $region12
    $region11: #{vis4mer_forward.4} parent=5 // pred_region
      %s185 = ssub.s32 %s12, 1
      // Predicated region
      $region13: #{vis4mer_forward.4} parent=11 // pred_check
        %p186 = pneg %p73
      $region14: #{vis4mer_forward.4} parent=11 // pred_check_branch
        %188 = sbr.rel (%p186) target = $region16
      $region15: #{vis4mer_forward.4} parent=11 // pred_region
        _
      $region16: #{vis4mer_forward.4} parent=11 // pred_fallthru
        _
      // Predicated region
      $region17: #{vis4mer_forward.4} parent=11 // pred_check
        %p189 = pneg %p94
      $region18: #{vis4mer_forward.4} parent=11 // pred_check_branch
        %191 = sbr.rel (%p189) target = $region20
      $region19: #{vis4mer_forward.4} parent=11 // pred_region
        _
      $region20: #{vis4mer_forward.4} parent=11 // pred_fallthru
        _
      // Predicated region
      $region21: #{vis4mer_forward.4} parent=11 // pred_check
        %p192 = pneg %p115
      $region22: #{vis4mer_forward.4} parent=11 // pred_check_branch
        %194 = sbr.rel (%p192) target = $region24
      $region23: #{vis4mer_forward.4} parent=11 // pred_region
        _
      $region24: #{vis4mer_forward.4} parent=11 // pred_fallthru
        _
    $region12: #{vis4mer_forward.4} parent=5 // pred_fallthru
      _
    %p195 = scmp.lt.s32.totalorder %s12, 2
    // Predicated region
    $region25: #{vis4mer_forward.4} parent=5 // pred_check
      %p196 = pneg %p195
    $region26: #{vis4mer_forward.4} parent=5 // pred_check_branch
      %198 = sbr.rel (%p196) target = $region28
    $region27: #{vis4mer_forward.4} parent=5 // pred_region
      // Predicated region
      $region29: #{vis4mer_forward.4} parent=27 // pred_check
        %p199 = pneg %p46
      $region30: #{vis4mer_forward.4} parent=27 // pred_check_branch
        %201 = sbr.rel (%p199) target = $region32
      $region31: #{vis4mer_forward.4} parent=27 // pred_region
        %p202 = scmp.lt.s32.totalorder %s19, 1
        %s203 = scalar_select %p202, %s19, 1
        %p204 = scmp.lt.s32.totalorder %s20, 0
        %s205 = scalar_select %p204, %s20, 0
        %s206 = sadd.s32 %s205, %s203
        %s207 = smul.addr %s206, 4
        %s208 = scalar_lea.vmem %s0, %s207
      $region32: #{vis4mer_forward.4} parent=27 // pred_fallthru
        _
    $region28: #{vis4mer_forward.4} parent=5 // pred_fallthru
      _
    %p209 = scmp.le.s32.totalorder 1, %s12
    %p210 = scmp.lt.s32.totalorder %s12, 3
    %p211 = pnand %p209, %p210
    %p212 = pneg %p211
    // Predicated region
    $region33: #{vis4mer_forward.4} parent=5 // pred_check
      _
    $region34: #{vis4mer_forward.4} parent=5 // pred_check_branch
      %214 = sbr.rel (%p211) target = $region36
    $region35: #{vis4mer_forward.4} parent=5 // pred_region
      %s215 = ssub.s32 %s12, 1
      %p216 = scmp.lt.s32.totalorder %s21, 1
      %s217 = scalar_select %p216, %s21, 1
      %p218 = scmp.lt.s32.totalorder %s22, 0
      %s219 = scalar_select %p218, %s22, 0
      %s220 = sadd.s32 %s219, %s217
      %s221 = smul.addr %s220, 4
      %s222 = scalar_lea.vmem %s0, %s221
      %p223 = pneg %p52
      %p224 = pneg %p49
      %p225 = pneg %p73
      %p226 = pneg %p70
      %p227 = pneg %p94
      %p228 = pneg %p91
      %p229 = pneg %p115
      %p230 = pneg %p112
      %p231 = pneg %p143
      %p232 = pneg %p140
      %p233 = scmp.lt.s32.totalorder %s21, 1
      %s234 = scalar_select %p233, %s21, 1
      %p235 = scmp.lt.s32.totalorder %s22, 0
      %s236 = scalar_select %p235, %s22, 0
      %s237 = smul.addr %s234, 4
      %s238 = sadd.s32 %s236, %s237
      %s239 = smul.addr %s238, 8
      %s240 = scalar_lea.vmem %s4, %s239
      %p241 = pneg %p171
      %p242 = pneg %p168
      %p243 = scmp.lt.s32.totalorder %s21, 1
      %s244 = scalar_select %p243, %s21, 1
      %p245 = scmp.lt.s32.totalorder %s22, 0
      %s246 = scalar_select %p245, %s22, 0
      %s247 = smul.addr %s244, 4
      %s248 = sadd.s32 %s246, %s247
      %s249 = smul.addr %s248, 8
      %s250 = scalar_lea.vmem %s5, %s249
      %p251 = scmp.lt.s32.totalorder %s21, 1
      %s252 = scalar_select %p251, %s21, 1
      %p253 = scmp.lt.s32.totalorder %s22, 0
      %s254 = scalar_select %p253, %s22, 0
      %s255 = sadd.s32 %s254, %s252
      %s256 = smul.addr %s255, 4
      %s257 = scalar_lea.vmem %s0, %s256
      %p258 = scmp.lt.s32.totalorder %s21, 1
      %s259 = scalar_select %p258, %s21, 1
      %p260 = scmp.lt.s32.totalorder %s22, 0
      %s261 = scalar_select %p260, %s22, 0
      %s262 = smul.addr %s259, 4
      %s263 = sadd.s32 %s261, %s262
      %s264 = smul.addr %s263, 8
      %s265 = scalar_lea.vmem %s4, %s264
      %p266 = scmp.lt.s32.totalorder %s21, 1
      %s267 = scalar_select %p266, %s21, 1
      %p268 = scmp.lt.s32.totalorder %s22, 0
      %s269 = scalar_select %p268, %s22, 0
      %s270 = smul.addr %s267, 4
      %s271 = sadd.s32 %s269, %s270
      %s272 = smul.addr %s271, 8
      %s273 = scalar_lea.vmem %s5, %s272
      %v275 = vld [vmem:[%s1] sm:$0xf]
      %v276 = vld [vmem:[%s1 + $0x4] sm:$0xf]
      %v277 = vld [vmem:[%s1 + $0x8] sm:$0xf]
      %v278 = vld [vmem:[%s1 + $0xc] sm:$0xf]
      %v279 = vld [vmem:[%s257] sm:$0xf]
      %v280 = vld [vmem:[%s2] sm:$0xff]
      %v281 = vld [vmem:[%s2 + $0x8] sm:$0xff]
      %v282 = vld [vmem:[%s2 + $0x10] sm:$0xff]
      %v283 = vld [vmem:[%s2 + $0x18] sm:$0xff]
      %285 = vset.pattern.permute.xlu0 0
      %286 = vperm.xlu0 %285, %v280
      %v287 = vpop.permute.xlu0 %286
      %290 = vset.pattern.permute.xlu0 0
      %291 = vperm.xlu0 %290, %v281
      %v292 = vpop.permute.xlu0 %291
      %295 = vset.pattern.permute.xlu0 0
      %296 = vperm.xlu0 %295, %v282
      %v297 = vpop.permute.xlu0 %296
      %300 = vset.pattern.permute.xlu0 0
      %301 = vperm.xlu0 %300, %v283
      %v302 = vpop.permute.xlu0 %301
      %v308 = vunpack.c.l.b16 %v275
      %v309 = vunpack.c.l.b16 %v276
      %v310 = vunpack.c.l.b16 %v277
      %v311 = vunpack.c.l.b16 %v278
      %v312 = vpack.c.b16 %v309, %v308
      %v313 = vpack.c.b16 %v311, %v310
      %vm314 = vcmask 130048
      %v316 = vsel %vm314, %v312, 0
      %v319 = vsel %vm314, %v313, 0
      %v322 = vsel %vm314, %v279, 0
      %324 = vmatpush.bf16.xpose.msra.mxu0 0
      %325 = vmatpush.bf16.xpose.msra.mxu0 0
      %326 = vmatpush.bf16.xpose.msra.mxu0 0
      %327 = vmatpush.bf16.xpose.msra.mxu0 0
      %328 = vmatpush.bf16.xpose.msra.mxu0 0
      %329 = vmatpush.bf16.xpose.msra.mxu0 0
      %330 = vmatpush.bf16.xpose.msra.mxu0 0
      %331 = vmatpush.bf16.xpose.msra.mxu0 %v322
      %332 = vmatmul.bf16.gmra.mxu0 %v316
      %v333 = vpop.f32.mrf.mxu0
      %v334 = vadd.f32 %v287, %v333
      %v335 = vpop.f32.mrf.mxu0
      %v336 = vadd.f32 %v292, %v335
      %337 = vmatmul.bf16.gmra.mxu0 %v319
      %v338 = vpop.f32.mrf.mxu0
      %v339 = vadd.f32 %v297, %v338
      %v340 = vpop.f32.mrf.mxu0
      %v341 = vadd.f32 %v302, %v340
      %342 = vdwg.mxu0
      %vm343 = vcmask 64512
      %344 = vst.msk [vmem:[%s265] sm:$0xff] %vm343, %v334
      %345 = vst.msk [vmem:[%s265 + $0x8] sm:$0xff] %vm343, %v336
      %346 = vst.msk [vmem:[%s265 + $0x10] sm:$0xff] %vm343, %v339
      %347 = vst.msk [vmem:[%s265 + $0x18] sm:$0xff] %vm343, %v341
      %v348 = vsel %vm343, %v334, 0.0
      %v349 = vsel %vm343, %v336, 0.0
      %v350 = vadd.f32 %v348, %v349
      %v351 = vsel %vm343, %v339, 0.0
      %v352 = vadd.f32 %v350, %v351
      %v353 = vsel %vm343, %v341, 0.0
      %v354 = vadd.f32 %v352, %v353
      %v355 = vrot.slane %v354, 4
      %v356 = vadd.f32 %v354, %v355
      %v357 = vrot.slane %v356, 2
      %v358 = vadd.f32 %v356, %v357
      %v359 = vrot.slane %v358, 1
      %v360 = vadd.f32 %v358, %v359
      %v361 = vrcp.pop 32.0
      %v362 = vmul.f32 32.0, %v361
      %v363 = vsub.f32 1.0, %v362
      %v364 = vmul.f32 %v361, %v363
      %v365 = vadd.f32 %v361, %v364
      %vm366 = vweird.f32 %v361
      %v367 = vsel %vm366, %v361, %v365
      %v368 = vmul.f32 %v360, %v367
      %v369 = vmul.f32 %v334, %v334
      %v370 = vmul.f32 %v336, %v336
      %v371 = vmul.f32 %v339, %v339
      %v372 = vmul.f32 %v341, %v341
      %v373 = vsel %vm343, %v369, 0.0
      %v374 = vsel %vm343, %v370, 0.0
      %v375 = vadd.f32 %v373, %v374
      %v376 = vsel %vm343, %v371, 0.0
      %v377 = vadd.f32 %v375, %v376
      %v378 = vsel %vm343, %v372, 0.0
      %v379 = vadd.f32 %v377, %v378
      %v380 = vrot.slane %v379, 4
      %v381 = vadd.f32 %v379, %v380
      %v382 = vrot.slane %v381, 2
      %v383 = vadd.f32 %v381, %v382
      %v384 = vrot.slane %v383, 1
      %v385 = vadd.f32 %v383, %v384
      %v386 = vmul.f32 %v385, %v367
      %v387 = vmul.f32 %v368, %v368
      %v388 = vsub.f32 %v386, %v387
      %v389 = vsub.f32 %v334, %v368
      %v390 = vsub.f32 %v336, %v368
      %v391 = vsub.f32 %v339, %v368
      %v392 = vsub.f32 %v341, %v368
      %v393 = vadd.f32 %v388, 1e-05
      %v394 = vrsqrt.pop %v393
      %v395 = vmul.f32 %v394, %v393
      %v396 = vmul.f32 %v395, %v394
      %v397 = vmul.f32 0.5, %v396
      %v398 = vsub.f32 1.5, %v397
      %v399 = vmul.f32 %v394, %v398
      %vm400 = vweird.f32 %v393
      %vm401 = vweird.f32 %v394
      %vm402 = vmor %vm400, %vm401
      %v403 = vsel %vm402, %v394, %v399
      %v404 = vmul.f32 %v389, %v403
      %v405 = vmul.f32 %v390, %v403
      %v406 = vmul.f32 %v391, %v403
      %v407 = vmul.f32 %v392, %v403
      %v408 = vld [vmem:[%s3] sm:$0xff]
      %v409 = vld [vmem:[%s3 + $0x8] sm:$0xff]
      %v410 = vld [vmem:[%s3 + $0x10] sm:$0xff]
      %v411 = vld [vmem:[%s3 + $0x18] sm:$0xff]
      %413 = vset.pattern.permute.xlu0 0
      %414 = vperm.xlu0 %413, %v408
      %v415 = vpop.permute.xlu0 %414
      %418 = vset.pattern.permute.xlu0 0
      %419 = vperm.xlu0 %418, %v409
      %v420 = vpop.permute.xlu0 %419
      %423 = vset.pattern.permute.xlu0 0
      %424 = vperm.xlu0 %423, %v410
      %v425 = vpop.permute.xlu0 %424
      %428 = vset.pattern.permute.xlu0 0
      %429 = vperm.xlu0 %428, %v411
      %v430 = vpop.permute.xlu0 %429
      %v432 = vmul.f32 %v404, %v415
      %v433 = vmul.f32 %v405, %v420
      %v434 = vmul.f32 %v406, %v425
      %v435 = vmul.f32 %v407, %v430
      %436 = vset.pattern.permute.xlu0 1
      %437 = vperm.xlu0 %436, %v408
      %v438 = vpop.permute.xlu0 %437
      %440 = vset.pattern.permute.xlu0 1
      %441 = vperm.xlu0 %440, %v409
      %v442 = vpop.permute.xlu0 %441
      %444 = vset.pattern.permute.xlu0 1
      %445 = vperm.xlu0 %444, %v410
      %v446 = vpop.permute.xlu0 %445
      %448 = vset.pattern.permute.xlu0 1
      %449 = vperm.xlu0 %448, %v411
      %v450 = vpop.permute.xlu0 %449
      %v452 = vadd.f32 %v432, %v438
      %v453 = vadd.f32 %v433, %v442
      %v454 = vadd.f32 %v434, %v446
      %v455 = vadd.f32 %v435, %v450
      %456 = vst.msk [vmem:[%s273] sm:$0xff] %vm343, %v452
      %457 = vst.msk [vmem:[%s273 + $0x8] sm:$0xff] %vm343, %v453
      %458 = vst.msk [vmem:[%s273 + $0x10] sm:$0xff] %vm343, %v454
      %459 = vst.msk [vmem:[%s273 + $0x18] sm:$0xff] %vm343, %v455
      %p460 = scmp.lt.s32.totalorder %s21, 1
      %s461 = scalar_select %p460, %s21, 1
      %p462 = scmp.lt.s32.totalorder %s22, 0
      %s463 = scalar_select %p462, %s22, 0
      %s464 = smul.addr %s461, 4
      %s465 = sadd.s32 %s463, %s464
      %s466 = smul.addr %s465, 8
      %s467 = scalar_lea.vmem %s4, %s466
      %p468 = scmp.lt.s32.totalorder %s21, 1
      %s469 = scalar_select %p468, %s21, 1
      %p470 = scmp.lt.s32.totalorder %s22, 0
      %s471 = scalar_select %p470, %s22, 0
      %s472 = smul.addr %s469, 4
      %s473 = sadd.s32 %s471, %s472
      %s474 = smul.addr %s473, 8
      %s475 = scalar_lea.vmem %s5, %s474
      // Predicated region
      $region37: #{vis4mer_forward.4} parent=35 // pred_check
        %p476 = pneg %p140
      $region38: #{vis4mer_forward.4} parent=35 // pred_check_branch
        %478 = sbr.rel (%p476) target = $region40
      $region39: #{vis4mer_forward.4} parent=35 // pred_region
        _
      $region40: #{vis4mer_forward.4} parent=35 // pred_fallthru
        _
      // Predicated region
      $region41: #{vis4mer_forward.4} parent=35 // pred_check
        %p479 = pneg %p168
      $region42: #{vis4mer_forward.4} parent=35 // pred_check_branch
        %481 = sbr.rel (%p479) target = $region44
      $region43: #{vis4mer_forward.4} parent=35 // pred_region
        _
      $region44: #{vis4mer_forward.4} parent=35 // pred_fallthru
        _
    $region36: #{vis4mer_forward.4} parent=5 // pred_fallthru
      _
    %p482 = scmp.le.s32.totalorder 2, %s12
    // Predicated region
    $region45: #{vis4mer_forward.4} parent=5 // pred_check
      %p483 = pneg %p482
    $region46: #{vis4mer_forward.4} parent=5 // pred_check_branch
      %485 = sbr.rel (%p483) target = $region48
    $region47: #{vis4mer_forward.4} parent=5 // pred_region
      %s486 = ssub.s32 %s12, 2
      // Predicated region
      $region49: #{vis4mer_forward.4} parent=47 // pred_check
        %p487 = pneg %p146
      $region50: #{vis4mer_forward.4} parent=47 // pred_check_branch
        %489 = sbr.rel (%p487) target = $region52
      $region51: #{vis4mer_forward.4} parent=47 // pred_region
        %p490 = scmp.lt.s32.totalorder %s23, 1
        %s491 = scalar_select %p490, %s23, 1
        %p492 = scmp.lt.s32.totalorder %s24, 0
        %s493 = scalar_select %p492, %s24, 0
        %s494 = smul.addr %s491, 4
        %s495 = sadd.s32 %s493, %s494
        %s496 = smul.addr %s495, 8
        %s497 = scalar_lea.vmem %s4, %s496
      $region52: #{vis4mer_forward.4} parent=47 // pred_fallthru
        _
      // Predicated region
      $region53: #{vis4mer_forward.4} parent=47 // pred_check
        %p498 = pneg %p174
      $region54: #{vis4mer_forward.4} parent=47 // pred_check_branch
        %500 = sbr.rel (%p498) target = $region56
      $region55: #{vis4mer_forward.4} parent=47 // pred_region
        %p501 = scmp.lt.s32.totalorder %s23, 1
        %s502 = scalar_select %p501, %s23, 1
        %p503 = scmp.lt.s32.totalorder %s24, 0
        %s504 = scalar_select %p503, %s24, 0
        %s505 = smul.addr %s502, 4
        %s506 = sadd.s32 %s504, %s505
        %s507 = smul.addr %s506, 8
        %s508 = scalar_lea.vmem %s5, %s507
      $region56: #{vis4mer_forward.4} parent=47 // pred_fallthru
        _
    $region48: #{vis4mer_forward.4} parent=5 // pred_fallthru
      _
  $region6: #{vis4mer_forward.4} parent=0 // loop_footer
    %s16 = sadd.s32 1, %s12
  $region7: #{vis4mer_forward.4} parent=0 // loop_footer_branch
    %11 = sbr.rel target = $region3
  $region8: #{vis4mer_forward.4} parent=0 // loop_exit
    _

// kernel: reverse.1
$region0: #{reverse.1}
  %s0 = inlined_call_operand.vmem [shape: f32[2,16,3], index: 0, kind: input, shape index: {}]
  %s1 = inlined_call_operand.vmem [shape: f32[2,16,3], index: 1, kind: output, shape index: {}]
  $region1: #{reverse.1} parent=0
    #allocation0 [shape = 'u8[16384]{0}', space=vmem, size = 0x4000, scoped, tag = 'operand span for operand 0']
    #allocation1 [shape = 'u8[8192]{0}', space=vmem, size = 0x2000, scoped, tag = 'packed  for operand 0']
    #allocation2 [shape = 'u8[8192]{0}', space=vmem, size = 0x2000, scoped, tag = 'operand span for operand 1']
    #allocation3 [shape = 'u8[4096]{0}', space=vmem, size = 0x1000, scoped, tag = 'packed  for operand 1']
    %s2 = scalar_lea.vmem [#allocation1], 4
    // Predicated region
    $region2: #{reverse.1} parent=1 // pred_check
      _
    $region3: #{reverse.1} parent=1 // pred_check_branch
      %4 = sbr.rel (0) target = $region5
    $region4: #{reverse.1} parent=1 // pred_region
      // Predicated region
      $region6: #{reverse.1} parent=4 // pred_check
        _
      $region7: #{reverse.1} parent=4 // pred_check_branch
        %6 = sbr.rel target = $region9
      $region8: #{reverse.1} parent=4 // pred_region
        // Predicated region
        $region21: #{reverse.1} parent=8 // pred_check
          _
        $region22: #{reverse.1} parent=8 // pred_check_branch
          %24 = sbr.rel (0) target = $region24
        $region23: #{reverse.1} parent=8 // pred_region
          loop: start=0, step=1, limit=1
          $region25: #{reverse.1} parent=23 // loop_pre_header
            _
          $region26: #{reverse.1} parent=23 // loop_header
            %s26 = sphi 0, %s30
            %p27 = scmp.ge.s32.totalorder %s26, 1
            %s31 = sphi %s0, %s0
            %s32 = sphi %s2, %s2
          $region27: #{reverse.1} parent=23 // loop_header_branch
            %29 = sbr.rel (%p27) target = $region31
          $region28: #{reverse.1} parent=23 // loop_body
            _
          $region29: #{reverse.1} parent=23 // loop_footer
            %s30 = sadd.s32 1, %s26
          $region30: #{reverse.1} parent=23 // loop_footer_branch
            %25 = sbr.rel target = $region26
          $region31: #{reverse.1} parent=23 // loop_exit
            _
          %s34 = ssub.s32 16, 1
          loop: start=0, step=1, limit=1
          $region32: #{reverse.1} parent=23 // loop_pre_header
            _
          $region33: #{reverse.1} parent=23 // loop_header
            %s36 = sphi 0, %s40
            %p37 = scmp.ge.s32.totalorder %s36, 1
            %s41 = sphi %s0, %s0
            %s42 = sphi %s2, %s2
          $region34: #{reverse.1} parent=23 // loop_header_branch
            %39 = sbr.rel (%p37) target = $region38
          $region35: #{reverse.1} parent=23 // loop_body
            %v43 = vld [vmem:[%s41] sm:%s34]
            %44 = vst [vmem:[%s42] sm:%s34] %v43
            %v45 = vld [vmem:[%s41 + $0x4] sm:%s34]
            %46 = vst [vmem:[%s42 + $0x8] sm:%s34] %v45
          $region36: #{reverse.1} parent=23 // loop_footer
            %s40 = sadd.s32 1, %s36
          $region37: #{reverse.1} parent=23 // loop_footer_branch
            %35 = sbr.rel target = $region33
          $region38: #{reverse.1} parent=23 // loop_exit
            _
        $region24: #{reverse.1} parent=8 // pred_fallthru
          _
      $region9: #{reverse.1} parent=4 // pred_fallthru
        _
      // Predicated region
      $region10: #{reverse.1} parent=4 // pred_check
        _
      $region11: #{reverse.1} parent=4 // pred_check_branch
        %8 = sbr.rel (0) target = $region13
      $region12: #{reverse.1} parent=4 // pred_region
        %s10 = ssub.s32 16, 1
        loop: start=0, step=1, limit=1
        $region14: #{reverse.1} parent=12 // loop_pre_header
          _
        $region15: #{reverse.1} parent=12 // loop_header
          %s12 = sphi 0, %s16
          %p13 = scmp.ge.s32.totalorder %s12, 1
          %s17 = sphi %s0, %s0
          %s18 = sphi %s2, %s2
        $region16: #{reverse.1} parent=12 // loop_header_branch
          %15 = sbr.rel (%p13) target = $region20
        $region17: #{reverse.1} parent=12 // loop_body
          %v19 = vld [vmem:[%s17] sm:%s10]
          %20 = vst [vmem:[%s18] sm:%s10] %v19
          %v21 = vld [vmem:[%s17 + $0x4] sm:%s10]
          %22 = vst [vmem:[%s18 + $0x8] sm:%s10] %v21
        $region18: #{reverse.1} parent=12 // loop_footer
          %s16 = sadd.s32 1, %s12
        $region19: #{reverse.1} parent=12 // loop_footer_branch
          %11 = sbr.rel target = $region15
        $region20: #{reverse.1} parent=12 // loop_exit
          _
      $region13: #{reverse.1} parent=4 // pred_fallthru
        _
    $region5: #{reverse.1} parent=1 // pred_fallthru
      _
    %47 = vnop
    %s49 = ssub.s32 16, 1
    %s50 = scalar_lea.vmem [#allocation1], 12
    %v51 = vld [vmem:[%s50] sm:%s49]
    %s52 = scalar_lea.vmem [#allocation0], 24
    %53 = vst [vmem:[%s52] sm:%s49] %v51
    %s54 = scalar_lea.vmem [#allocation1], 8
    %v55 = vld [vmem:[%s54] sm:%s49]
    %s56 = scalar_lea.vmem [#allocation0], 16
    %57 = vst [vmem:[%s56] sm:%s49] %v55
    %s58 = scalar_lea.vmem [#allocation1], 4
    %v59 = vld [vmem:[%s58] sm:%s49]
    %s60 = scalar_lea.vmem [#allocation0], 8
    %61 = vst [vmem:[%s60] sm:%s49] %v59
    %v62 = vld [vmem:[#allocation1] sm:%s49]
    %63 = vst [vmem:[#allocation0] sm:%s49] %v62
    %s64 = scalar_lea.vmem [#allocation0], 7
    %v65 = vld [vmem:[%s64] ss:$-1 sm:$0xff]
    %v66 = vrot.slane %v65, 5
    %67 = vst [vmem:[#allocation2] sm:$0xff] %v66
    %s68 = scalar_lea.vmem [#allocation0], 8
    %s69 = scalar_lea.vmem %s68, 7 [#allocation0]
    %v70 = vld [vmem:[%s69] ss:$-1 sm:$0xff]
    %v71 = vrot.slane %v70, 5
    %v72 = vlaneseq
    %v73 = vshrl.u32 %v72, 7
    %vm74 = vcmp.lt.s32.totalorder %v73, 3
    %75 = vst.msk [vmem:[#allocation2] sm:$0xff] %vm74, %v71
    %s76 = scalar_lea.vmem [#allocation2], 8
    %s77 = scalar_lea.vmem [#allocation0], 16
    %s78 = scalar_lea.vmem %s77, 7 [#allocation0]
    %v79 = vld [vmem:[%s78] ss:$-1 sm:$0xff]
    %v80 = vrot.slane %v79, 5
    %81 = vst [vmem:[%s76] sm:$0xff] %v80
    %s82 = scalar_lea.vmem %s77, 8 [#allocation0]
    %s83 = scalar_lea.vmem %s82, 7 [#allocation0]
    %v84 = vld [vmem:[%s83] ss:$-1 sm:$0xff]
    %v85 = vrot.slane %v84, 5
    %v86 = vlaneseq
    %v87 = vshrl.u32 %v86, 7
    %vm88 = vcmp.lt.s32.totalorder %v87, 3
    %89 = vst.msk [vmem:[%s76] sm:$0xff] %vm88, %v85
    %s91 = ssub.s32 16, 1
    %v92 = vld [vmem:[#allocation2] sm:%s91]
    %s94 = ssub.s32 16, 1
    %95 = vst [vmem:[#allocation3] sm:%s94] %v92
    %s96 = scalar_lea.vmem [#allocation2], 8
    %v97 = vld [vmem:[%s96] sm:%s91]
    %s99 = ssub.s32 16, 1
    %s100 = scalar_lea.vmem [#allocation3], 4
    %101 = vst [vmem:[%s100] sm:%s99] %v97
    // Predicated region
    $region39: #{reverse.1} parent=1 // pred_check
      _
    $region40: #{reverse.1} parent=1 // pred_check_branch
      %103 = sbr.rel (0) target = $region42
    $region41: #{reverse.1} parent=1 // pred_region
      // Predicated region
      $region43: #{reverse.1} parent=41 // pred_check
        _
      $region44: #{reverse.1} parent=41 // pred_check_branch
        %105 = sbr.rel target = $region46
      $region45: #{reverse.1} parent=41 // pred_region
        // Predicated region
        $region58: #{reverse.1} parent=45 // pred_check
          _
        $region59: #{reverse.1} parent=45 // pred_check_branch
          %123 = sbr.rel (0) target = $region61
        $region60: #{reverse.1} parent=45 // pred_region
          loop: start=0, step=1, limit=1
          $region62: #{reverse.1} parent=60 // loop_pre_header
            _
          $region63: #{reverse.1} parent=60 // loop_header
            %s125 = sphi 0, %s129
            %p126 = scmp.ge.s32.totalorder %s125, 1
            %s130 = sphi [#allocation3], [#allocation3]
            %s131 = sphi %s1, %s1
          $region64: #{reverse.1} parent=60 // loop_header_branch
            %128 = sbr.rel (%p126) target = $region68
          $region65: #{reverse.1} parent=60 // loop_body
            _
          $region66: #{reverse.1} parent=60 // loop_footer
            %s129 = sadd.s32 1, %s125
          $region67: #{reverse.1} parent=60 // loop_footer_branch
            %124 = sbr.rel target = $region63
          $region68: #{reverse.1} parent=60 // loop_exit
            _
          %s133 = ssub.s32 16, 1
          loop: start=0, step=1, limit=1
          $region69: #{reverse.1} parent=60 // loop_pre_header
            _
          $region70: #{reverse.1} parent=60 // loop_header
            %s135 = sphi 0, %s139
            %p136 = scmp.ge.s32.totalorder %s135, 1
            %s140 = sphi [#allocation3], [#allocation3]
            %s141 = sphi %s1, %s1
          $region71: #{reverse.1} parent=60 // loop_header_branch
            %138 = sbr.rel (%p136) target = $region75
          $region72: #{reverse.1} parent=60 // loop_body
            %v142 = vld [vmem:[%s140] sm:%s133]
            %143 = vst [vmem:[%s141] sm:%s133] %v142
            %v144 = vld [vmem:[%s140 + $0x4] sm:%s133]
            %145 = vst [vmem:[%s141 + $0x4] sm:%s133] %v144
          $region73: #{reverse.1} parent=60 // loop_footer
            %s139 = sadd.s32 1, %s135
          $region74: #{reverse.1} parent=60 // loop_footer_branch
            %134 = sbr.rel target = $region70
          $region75: #{reverse.1} parent=60 // loop_exit
            _
        $region61: #{reverse.1} parent=45 // pred_fallthru
          _
      $region46: #{reverse.1} parent=41 // pred_fallthru
        _
      // Predicated region
      $region47: #{reverse.1} parent=41 // pred_check
        _
      $region48: #{reverse.1} parent=41 // pred_check_branch
        %107 = sbr.rel (0) target = $region50
      $region49: #{reverse.1} parent=41 // pred_region
        %s109 = ssub.s32 16, 1
        loop: start=0, step=1, limit=1
        $region51: #{reverse.1} parent=49 // loop_pre_header
          _
        $region52: #{reverse.1} parent=49 // loop_header
          %s111 = sphi 0, %s115
          %p112 = scmp.ge.s32.totalorder %s111, 1
          %s116 = sphi [#allocation3], [#allocation3]
          %s117 = sphi %s1, %s1
        $region53: #{reverse.1} parent=49 // loop_header_branch
          %114 = sbr.rel (%p112) target = $region57
        $region54: #{reverse.1} parent=49 // loop_body
          %v118 = vld [vmem:[%s116] sm:%s109]
          %119 = vst [vmem:[%s117] sm:%s109] %v118
          %v120 = vld [vmem:[%s116 + $0x4] sm:%s109]
          %121 = vst [vmem:[%s117 + $0x4] sm:%s109] %v120
        $region55: #{reverse.1} parent=49 // loop_footer
          %s115 = sadd.s32 1, %s111
        $region56: #{reverse.1} parent=49 // loop_footer_branch
          %110 = sbr.rel target = $region52
        $region57: #{reverse.1} parent=49 // loop_exit
          _
      $region50: #{reverse.1} parent=41 // pred_fallthru
        _
    $region42: #{reverse.1} parent=1 // pred_fallthru
      _
    %146 = vnop

// kernel: vis4mer_forward.5
$region0: #{vis4mer_forward.5}
  #allocation0 [shape = 'u32[]', space=smem, size = 0x4, offset = 0x4, fixed_abs, tag = 'smem constant byte address 0x4 - core index']
  #allocation1 [shape = 'u32[72,128]{1,0:T(1,128)}', space=vmem, size = 0x9000, scoped, tag = 'internal scratch']
  %s0 = inlined_call_operand.vmem [shape: bf16[2,32,4], index: 0, kind: input, shape index: {}]
  %s1 = inlined_call_operand.vmem [shape: f32[2,32,4], index: 1, kind: input, shape index: {}]
  %s2 = inlined_call_operand.vmem [shape: bf16[32,32], index: 2, kind: input, shape index: {}]
  %s3 = inlined_call_operand.vmem [shape: bf16[16,32], index: 3, kind: input, shape index: {}]
  %s4 = inlined_call_operand.vmem [shape: f32[16,1], index: 4, kind: input, shape index: {}]
  %s5 = inlined_call_operand.vmem [shape: f32[16,2], index: 5, kind: input, shape index: {}]
  %s6 = inlined_call_operand.vmem [shape: f32[2,16,4], index: 6, kind: output, shape index: {0}]
  %s7 = inlined_call_operand.vmem [shape: f32[2,16,4], index: 7, kind: output, shape index: {1}]
  %8 = xla_tuple %s6, %s7
  %s9 = sld [smem:[#allocation0]]
  $region65: #{vis4mer_forward.5} parent=0
    _
  %s11 = ssub.s32 1, %s9
  %s12 = scalar_select 0, %s11, %s9
  loop: start=0, step=1, limit=4
  $region2: #{vis4mer_forward.5} parent=0 // loop_pre_header
    _
  $region3: #{vis4mer_forward.5} parent=0 // loop_header
    %s14 = sphi 0, %s18
    %p15 = scmp.ge.s32.totalorder %s14, 4
    %s21 = sphi 0, %s33
    %s22 = sphi 0, %s29
    %s23 = sphi 0, %s21
    %s24 = sphi 0, %s22
    %s25 = sphi 0, %s23
    %s26 = sphi 0, %s24
    %s38 = sphi 0, %s40
    %s41 = sphi 0, %s38
    %s42 = sphi 0, %s41
    %s58 = sphi 0, %s42
    %s66 = sphi 0, %s68
    %s69 = sphi 0, %s66
    %s70 = sphi 0, %s69
    %s86 = sphi 0, %s70
    %s90 = sphi 0, %s90
    %s92 = sphi 0, %s90
    %s93 = sphi 0, %s92
    %s107 = sphi 0, %s93
    %s111 = sphi 0, %s111
    %s113 = sphi 0, %s111
    %s114 = sphi 0, %s113
    %s128 = sphi 0, %s114
    %s132 = sphi 0, %s132
    %s134 = sphi 0, %s132
    %s135 = sphi 0, %s134
    %s149 = sphi 0, %s135
    %s153 = sphi 0, %s153
    %s155 = sphi 0, %s153
    %s156 = sphi 0, %s155
    %s170 = sphi 0, %s156
    %s178 = sphi 0, %s180
    %s181 = sphi 0, %s178
    %s182 = sphi 0, %s181
    %s198 = sphi 0, %s182
    %s206 = sphi 0, %s208
    %s209 = sphi 0, %s206
    %s210 = sphi 0, %s209
    %s226 = sphi 0, %s210
  $region4: #{vis4mer_forward.5} parent=0 // loop_header_branch
    %17 = sbr.rel (%p15) target = $region8
  $region5: #{vis4mer_forward.5} parent=0 // loop_body
    %s19 = ssub.s32 %s14, 1
    %s20 = ssub.s32 %s14, 2
    %s27 = sadd.s32 1, %s22
    %p28 = scmp.ge.s32.totalorder %s27, 1
    %s29 = scalar_select %p28, 0, %s27
    %s30 = sadd.s32 1, %s21
    %s31 = scalar_select %p28, %s30, %s21
    %p32 = scmp.ge.s32.totalorder %s31, 2
    %s33 = scalar_select %p32, 0, %s31
    %s34 = ssub.s32 %s21, %s33
    %s35 = ssub.s32 %s22, %s29
    %s36 = sor.u32 %s34, %s35
    %p37 = scmp.eq.s32.totalorder %s36, 0
    %s39 = sadd.s32 %s38, 1
    %s40 = scalar_select %p37, %s38, %s39
    %p43 = pneg %p37
    %p44 = scmp.eq.s32.totalorder %s14, 1
    %p45 = por %p43, %p44
    %p46 = scmp.ne.s32.totalorder %s38, %s41
    %p47 = scmp.eq.s32.totalorder %s14, 0
    %p48 = por %p46, %p47
    %p49 = scmp.ne.s32.totalorder %s38, %s41
    %p50 = scmp.eq.s32.totalorder %s19, 1
    %p51 = por %p49, %p50
    %p52 = scmp.ne.s32.totalorder %s41, %s42
    %p53 = scmp.eq.s32.totalorder %s19, 0
    %p54 = por %p52, %p53
    %p55 = scmp.ne.s32.totalorder %s41, %s42
    %p56 = scmp.eq.s32.totalorder %s20, 1
    %p57 = por %p55, %p56
    %p59 = scmp.ne.s32.totalorder %s42, %s58
    %p60 = scmp.eq.s32.totalorder %s20, 0
    %p61 = por %p59, %p60
    %s62 = ssub.s32 %s21, %s33
    %s63 = ssub.s32 %s22, %s29
    %s64 = sor.u32 %s62, %s63
    %p65 = scmp.eq.s32.totalorder %s64, 0
    %s67 = sadd.s32 %s66, 1
    %s68 = scalar_select %p65, %s66, %s67
    %p71 = pneg %p65
    %p72 = scmp.eq.s32.totalorder %s14, 1
    %p73 = por %p71, %p72
    %p74 = scmp.ne.s32.totalorder %s66, %s69
    %p75 = scmp.eq.s32.totalorder %s14, 0
    %p76 = por %p74, %p75
    %p77 = scmp.ne.s32.totalorder %s66, %s69
    %p78 = scmp.eq.s32.totalorder %s19, 1
    %p79 = por %p77, %p78
    %p80 = scmp.ne.s32.totalorder %s69, %s70
    %p81 = scmp.eq.s32.totalorder %s19, 0
    %p82 = por %p80, %p81
    %p83 = scmp.ne.s32.totalorder %s69, %s70
    %p84 = scmp.eq.s32.totalorder %s20, 1
    %p85 = por %p83, %p84
    %p87 = scmp.ne.s32.totalorder %s70, %s86
    %p88 = scmp.eq.s32.totalorder %s20, 0
    %p89 = por %p87, %p88
    %s91 = sadd.s32 %s90, 1
    %p94 = scmp.eq.s32.totalorder %s14, 1
    %p95 = scmp.ne.s32.totalorder %s90, %s92
    %p96 = scmp.eq.s32.totalorder %s14, 0
    %p97 = por %p95, %p96
    %p98 = scmp.ne.s32.totalorder %s90, %s92
    %p99 = scmp.eq.s32.totalorder %s19, 1
    %p100 = por %p98, %p99
    %p101 = scmp.ne.s32.totalorder %s92, %s93
    %p102 = scmp.eq.s32.totalorder %s19, 0
    %p103 = por %p101, %p102
    %p104 = scmp.ne.s32.totalorder %s92, %s93
    %p105 = scmp.eq.s32.totalorder %s20, 1
    %p106 = por %p104, %p105
    %p108 = scmp.ne.s32.totalorder %s93, %s107
    %p109 = scmp.eq.s32.totalorder %s20, 0
    %p110 = por %p108, %p109
    %s112 = sadd.s32 %s111, 1
    %p115 = scmp.eq.s32.totalorder %s14, 1
    %p116 = scmp.ne.s32.totalorder %s111, %s113
    %p117 = scmp.eq.s32.totalorder %s14, 0
    %p118 = por %p116, %p117
    %p119 = scmp.ne.s32.totalorder %s111, %s113
    %p120 = scmp.eq.s32.totalorder %s19, 1
    %p121 = por %p119, %p120
    %p122 = scmp.ne.s32.totalorder %s113, %s114
    %p123 = scmp.eq.s32.totalorder %s19, 0
    %p124 = por %p122, %p123
    %p125 = scmp.ne.s32.totalorder %s113, %s114
    %p126 = scmp.eq.s32.totalorder %s20, 1
    %p127 = por %p125, %p126
    %p129 = scmp.ne.s32.totalorder %s114, %s128
    %p130 = scmp.eq.s32.totalorder %s20, 0
    %p131 = por %p129, %p130
    %s133 = sadd.s32 %s132, 1
    %p136 = scmp.eq.s32.totalorder %s14, 1
    %p137 = scmp.ne.s32.totalorder %s132, %s134
    %p138 = scmp.eq.s32.totalorder %s14, 0
    %p139 = por %p137, %p138
    %p140 = scmp.ne.s32.totalorder %s132, %s134
    %p141 = scmp.eq.s32.totalorder %s19, 1
    %p142 = por %p140, %p141
    %p143 = scmp.ne.s32.totalorder %s134, %s135
    %p144 = scmp.eq.s32.totalorder %s19, 0
    %p145 = por %p143, %p144
    %p146 = scmp.ne.s32.totalorder %s134, %s135
    %p147 = scmp.eq.s32.totalorder %s20, 1
    %p148 = por %p146, %p147
    %p150 = scmp.ne.s32.totalorder %s135, %s149
    %p151 = scmp.eq.s32.totalorder %s20, 0
    %p152 = por %p150, %p151
    %s154 = sadd.s32 %s153, 1
    %p157 = scmp.eq.s32.totalorder %s14, 1
    %p158 = scmp.ne.s32.totalorder %s153, %s155
    %p159 = scmp.eq.s32.totalorder %s14, 0
    %p160 = por %p158, %p159
    %p161 = scmp.ne.s32.totalorder %s153, %s155
    %p162 = scmp.eq.s32.totalorder %s19, 1
    %p163 = por %p161, %p162
    %p164 = scmp.ne.s32.totalorder %s155, %s156
    %p165 = scmp.eq.s32.totalorder %s19, 0
    %p166 = por %p164, %p165
    %p167 = scmp.ne.s32.totalorder %s155, %s156
    %p168 = scmp.eq.s32.totalorder %s20, 1
    %p169 = por %p167, %p168
    %p171 = scmp.ne.s32.totalorder %s156, %s170
    %p172 = scmp.eq.s32.totalorder %s20, 0
    %p173 = por %p171, %p172
    %s174 = ssub.s32 %s21, %s33
    %s175 = ssub.s32 %s22, %s29
    %s176 = sor.u32 %s174, %s175
    %p177 = scmp.eq.s32.totalorder %s176, 0
    %s179 = sadd.s32 %s178, 1
    %s180 = scalar_select %p177, %s178, %s179
    %p183 = pneg %p177
    %p184 = scmp.eq.s32.totalorder %s14, 1
    %p185 = por %p183, %p184
    %p186 = scmp.ne.s32.totalorder %s178, %s181
    %p187 = scmp.eq.s32.totalorder %s14, 0
    %p188 = por %p186, %p187
    %p189 = scmp.ne.s32.totalorder %s178, %s181
    %p190 = scmp.eq.s32.totalorder %s19, 1
    %p191 = por %p189, %p190
    %p192 = scmp.ne.s32.totalorder %s181, %s182
    %p193 = scmp.eq.s32.totalorder %s19, 0
    %p194 = por %p192, %p193
    %p195 = scmp.ne.s32.totalorder %s181, %s182
    %p196 = scmp.eq.s32.totalorder %s20, 1
    %p197 = por %p195, %p196
    %p199 = scmp.ne.s32.totalorder %s182, %s198
    %p200 = scmp.eq.s32.totalorder %s20, 0
    %p201 = por %p199, %p200
    %s202 = ssub.s32 %s21, %s33
    %s203 = ssub.s32 %s22, %s29
    %s204 = sor.u32 %s202, %s203
    %p205 = scmp.eq.s32.totalorder %s204, 0
    %s207 = sadd.s32 %s206, 1
    %s208 = scalar_select %p205, %s206, %s207
    %p211 = pneg %p205
    %p212 = scmp.eq.s32.totalorder %s14, 1
    %p213 = por %p211, %p212
    %p214 = scmp.ne.s32.totalorder %s206, %s209
    %p215 = scmp.eq.s32.totalorder %s14, 0
    %p216 = por %p214, %p215
    %p217 = scmp.ne.s32.totalorder %s206, %s209
    %p218 = scmp.eq.s32.totalorder %s19, 1
    %p219 = por %p217, %p218
    %p220 = scmp.ne.s32.totalorder %s209, %s210
    %p221 = scmp.eq.s32.totalorder %s19, 0
    %p222 = por %p220, %p221
    %p223 = scmp.ne.s32.totalorder %s209, %s210
    %p224 = scmp.eq.s32.totalorder %s20, 1
    %p225 = por %p223, %p224
    %p227 = scmp.ne.s32.totalorder %s210, %s226
    %p228 = scmp.eq.s32.totalorder %s20, 0
    %p229 = por %p227, %p228
    %p230 = scmp.le.s32.totalorder 1, %s14
    %p231 = scmp.lt.s32.totalorder %s14, 3
    %p232 = pnand %p230, %p231
    %p233 = pneg %p232
    // Predicated region
    $region9: #{vis4mer_forward.5} parent=5 // pred_check
      _
    $region10: #{vis4mer_forward.5} parent=5 // pred_check_branch
      %235 = sbr.rel (%p232) target = $region12
    $region11: #{vis4mer_forward.5} parent=5 // pred_region
      %s236 = ssub.s32 %s14, 1
      // Predicated region
      $region13: #{vis4mer_forward.5} parent=11 // pred_check
        %p237 = pneg %p103
      $region14: #{vis4mer_forward.5} parent=11 // pred_check_branch
        %239 = sbr.rel (%p237) target = $region16
      $region15: #{vis4mer_forward.5} parent=11 // pred_region
        _
      $region16: #{vis4mer_forward.5} parent=11 // pred_fallthru
        _
      // Predicated region
      $region17: #{vis4mer_forward.5} parent=11 // pred_check
        %p240 = pneg %p124
      $region18: #{vis4mer_forward.5} parent=11 // pred_check_branch
        %242 = sbr.rel (%p240) target = $region20
      $region19: #{vis4mer_forward.5} parent=11 // pred_region
        _
      $region20: #{vis4mer_forward.5} parent=11 // pred_fallthru
        _
      // Predicated region
      $region21: #{vis4mer_forward.5} parent=11 // pred_check
        %p243 = pneg %p145
      $region22: #{vis4mer_forward.5} parent=11 // pred_check_branch
        %245 = sbr.rel (%p243) target = $region24
      $region23: #{vis4mer_forward.5} parent=11 // pred_region
        _
      $region24: #{vis4mer_forward.5} parent=11 // pred_fallthru
        _
      // Predicated region
      $region25: #{vis4mer_forward.5} parent=11 // pred_check
        %p246 = pneg %p166
      $region26: #{vis4mer_forward.5} parent=11 // pred_check_branch
        %248 = sbr.rel (%p246) target = $region28
      $region27: #{vis4mer_forward.5} parent=11 // pred_region
        _
      $region28: #{vis4mer_forward.5} parent=11 // pred_fallthru
        _
    $region12: #{vis4mer_forward.5} parent=5 // pred_fallthru
      _
    %p249 = scmp.lt.s32.totalorder %s14, 2
    // Predicated region
    $region29: #{vis4mer_forward.5} parent=5 // pred_check
      %p250 = pneg %p249
    $region30: #{vis4mer_forward.5} parent=5 // pred_check_branch
      %252 = sbr.rel (%p250) target = $region32
    $region31: #{vis4mer_forward.5} parent=5 // pred_region
      // Predicated region
      $region33: #{vis4mer_forward.5} parent=31 // pred_check
        %p253 = pneg %p48
      $region34: #{vis4mer_forward.5} parent=31 // pred_check_branch
        %255 = sbr.rel (%p253) target = $region36
      $region35: #{vis4mer_forward.5} parent=31 // pred_region
        %p256 = scmp.lt.s32.totalorder %s21, 1
        %s257 = scalar_select %p256, %s21, 1
        %p258 = scmp.lt.s32.totalorder %s22, 0
        %s259 = scalar_select %p258, %s22, 0
        %s260 = smul.addr %s257, 4
        %s261 = sadd.s32 %s259, %s260
        %s262 = smul.addr %s261, 4
        %s263 = scalar_lea.vmem %s0, %s262
      $region36: #{vis4mer_forward.5} parent=31 // pred_fallthru
        _
      // Predicated region
      $region37: #{vis4mer_forward.5} parent=31 // pred_check
        %p264 = pneg %p76
      $region38: #{vis4mer_forward.5} parent=31 // pred_check_branch
        %266 = sbr.rel (%p264) target = $region40
      $region39: #{vis4mer_forward.5} parent=31 // pred_region
        %p267 = scmp.lt.s32.totalorder %s21, 1
        %s268 = scalar_select %p267, %s21, 1
        %p269 = scmp.lt.s32.totalorder %s22, 0
        %s270 = scalar_select %p269, %s22, 0
        %s271 = smul.addr %s268, 4
        %s272 = sadd.s32 %s270, %s271
        %s273 = smul.addr %s272, 8
        %s274 = scalar_lea.vmem %s1, %s273
      $region40: #{vis4mer_forward.5} parent=31 // pred_fallthru
        _
    $region32: #{vis4mer_forward.5} parent=5 // pred_fallthru
      _
    %p275 = scmp.le.s32.totalorder 1, %s14
    %p276 = scmp.lt.s32.totalorder %s14, 3
    %p277 = pnand %p275, %p276
    %p278 = pneg %p277
    // Predicated region
    $region41: #{vis4mer_forward.5} parent=5 // pred_check
      _
    $region42: #{vis4mer_forward.5} parent=5 // pred_check_branch
      %280 = sbr.rel (%p277) target = $region44
    $region43: #{vis4mer_forward.5} parent=5 // pred_region
      %s281 = ssub.s32 %s14, 1
      %p282 = scmp.lt.s32.totalorder %s23, 1
      %s283 = scalar_select %p282, %s23, 1
      %p284 = scmp.lt.s32.totalorder %s24, 0
      %s285 = scalar_select %p284, %s24, 0
      %s286 = smul.addr %s283, 4
      %s287 = sadd.s32 %s285, %s286
      %s288 = smul.addr %s287, 4
      %s289 = scalar_lea.vmem %s0, %s288
      %p290 = pneg %p54
      %p291 = pneg %p51
      %p292 = scmp.lt.s32.totalorder %s23, 1
      %s293 = scalar_select %p292, %s23, 1
      %p294 = scmp.lt.s32.totalorder %s24, 0
      %s295 = scalar_select %p294, %s24, 0
      %s296 = smul.addr %s293, 4
      %s297 = sadd.s32 %s295, %s296
      %s298 = smul.addr %s297, 8
      %s299 = scalar_lea.vmem %s1, %s298
      %p300 = pneg %p82
      %p301 = pneg %p79
      %p302 = pneg %p103
      %p303 = pneg %p100
      %p304 = pneg %p124
      %p305 = pneg %p121
      %p306 = pneg %p145
      %p307 = pneg %p142
      %p308 = pneg %p166
      %p309 = pneg %p163
      %p310 = pneg %p194
      %p311 = pneg %p191
      %p312 = scmp.lt.s32.totalorder %s23, 1
      %s313 = scalar_select %p312, %s23, 1
      %p314 = scmp.lt.s32.totalorder %s24, 0
      %s315 = scalar_select %p314, %s24, 0
      %s316 = smul.addr %s313, 2
      %s317 = sadd.s32 %s315, %s316
      %s318 = smul.addr %s317, 8
      %s319 = scalar_lea.vmem %s6, %s318
      %p320 = pneg %p222
      %p321 = pneg %p219
      %p322 = scmp.lt.s32.totalorder %s23, 1
      %s323 = scalar_select %p322, %s23, 1
      %p324 = scmp.lt.s32.totalorder %s24, 0
      %s325 = scalar_select %p324, %s24, 0
      %s326 = smul.addr %s323, 2
      %s327 = sadd.s32 %s325, %s326
      %s328 = smul.addr %s327, 8
      %s329 = scalar_lea.vmem %s7, %s328
      %p330 = scmp.lt.s32.totalorder %s23, 1
      %s331 = scalar_select %p330, %s23, 1
      %p332 = scmp.lt.s32.totalorder %s24, 0
      %s333 = scalar_select %p332, %s24, 0
      %s334 = smul.addr %s331, 4
      %s335 = sadd.s32 %s333, %s334
      %s336 = smul.addr %s335, 4
      %s337 = scalar_lea.vmem %s0, %s336
      %p338 = scmp.lt.s32.totalorder %s23, 1
      %s339 = scalar_select %p338, %s23, 1
      %p340 = scmp.lt.s32.totalorder %s24, 0
      %s341 = scalar_select %p340, %s24, 0
      %s342 = smul.addr %s339, 4
      %s343 = sadd.s32 %s341, %s342
      %s344 = smul.addr %s343, 8
      %s345 = scalar_lea.vmem %s1, %s344
      %p346 = scmp.lt.s32.totalorder %s23, 1
      %s347 = scalar_select %p346, %s23, 1
      %p348 = scmp.lt.s32.totalorder %s24, 0
      %s349 = scalar_select %p348, %s24, 0
      %s350 = smul.addr %s347, 2
      %s351 = sadd.s32 %s349, %s350
      %s352 = smul.addr %s351, 8
      %s353 = scalar_lea.vmem %s6, %s352
      %p354 = scmp.lt.s32.totalorder %s23, 1
      %s355 = scalar_select %p354, %s23, 1
      %p356 = scmp.lt.s32.totalorder %s24, 0
      %s357 = scalar_select %p356, %s24, 0
      %s358 = smul.addr %s355, 2
      %s359 = sadd.s32 %s357, %s358
      %s360 = smul.addr %s359, 8
      %s361 = scalar_lea.vmem %s7, %s360
      %v363 = vld [vmem:[%s2] sm:$0xf]
      %v364 = vld [vmem:[%s2 + $0x4] sm:$0xf]
      %v365 = vld [vmem:[%s2 + $0x8] sm:$0xf]
      %v366 = vld [vmem:[%s2 + $0xc] sm:$0xf]
      %v367 = vld [vmem:[%s337] sm:$0xf]
      %v368 = vld [vmem:[%s337 + $0x4] sm:$0xf]
      %v369 = vld [vmem:[%s337 + $0x8] sm:$0xf]
      %v370 = vld [vmem:[%s337 + $0xc] sm:$0xf]
      %v371 = vld [vmem:[%s345] sm:$0xff]
      %v372 = vld [vmem:[%s345 + $0x8] sm:$0xff]
      %v373 = vld [vmem:[%s345 + $0x10] sm:$0xff]
      %v374 = vld [vmem:[%s345 + $0x18] sm:$0xff]
      %v379 = vunpack.c.l.b16 %v363
      %v380 = vunpack.c.l.b16 %v364
      %v381 = vunpack.c.l.b16 %v365
      %v382 = vunpack.c.l.b16 %v366
      %v383 = vpack.c.b16 %v380, %v379
      %v384 = vpack.c.b16 %v382, %v381
      %v389 = vunpack.c.l.b16 %v367
      %v390 = vunpack.c.l.b16 %v368
      %v391 = vunpack.c.l.b16 %v369
      %v392 = vunpack.c.l.b16 %v370
      %v393 = vpack.c.b16 %v390, %v389
      %v394 = vpack.c.b16 %v392, %v391
      %vm397 = vcmask 261120
      %v399 = vsel %vm397, %v383, 0
      %v402 = vsel %vm397, %v384, 0
      %404 = vmatpush.bf16.msra.mxu0 0
      %405 = vmatpush.bf16.msra.mxu0 0
      %406 = vmatpush.bf16.msra.mxu0 0
      %407 = vmatpush.bf16.msra.mxu0 0
      %408 = vmatpush.bf16.msra.mxu0 0
      %409 = vmatpush.bf16.msra.mxu0 0
      %410 = vmatpush.bf16.msra.mxu0 %v394
      %411 = vmatpush.bf16.msra.mxu0 %v393
      %412 = vmatmul.bf16.gmra.mxu0 %v399
      %v413 = vpop.f32.mrf.mxu0
      %v414 = vadd.f32 %v371, %v413
      %v415 = vpop.f32.mrf.mxu0
      %v416 = vadd.f32 %v372, %v415
      %417 = vmatmul.bf16.gmra.mxu0 %v402
      %v418 = vpop.f32.mrf.mxu0
      %v419 = vadd.f32 %v373, %v418
      %v420 = vpop.f32.mrf.mxu0
      %v421 = vadd.f32 %v374, %v420
      %422 = vdwg.mxu0
      %v423 = vld [vmem:[%s3] sm:$0xf]
      %v424 = vld [vmem:[%s3 + $0x4] sm:$0xf]
      %v425 = vpack.c.bf16 %v416, %v414
      %v426 = vpack.c.bf16 %v421, %v419
      %v427 = vld [vmem:[%s4] sm:$0xff]
      %v428 = vld [vmem:[%s4 + $0x8] sm:$0xff]
      %430 = vset.pattern.permute.xlu0 0
      %431 = vperm.xlu0 %430, %v427
      %v432 = vpop.permute.xlu0 %431
      %435 = vset.pattern.permute.xlu0 0
      %436 = vperm.xlu0 %435, %v428
      %v437 = vpop.permute.xlu0 %436
      %v441 = vunpack.c.l.b16 %v423
      %v442 = vunpack.c.l.b16 %v424
      %v443 = vpack.c.b16 %v442, %v441
      %v445 = vsel %vm397, %v443, 0
      %447 = vmatpush.bf16.msra.mxu0 0
      %448 = vmatpush.bf16.msra.mxu0 0
      %449 = vmatpush.bf16.msra.mxu0 0
      %450 = vmatpush.bf16.msra.mxu0 0
      %451 = vmatpush.bf16.msra.mxu0 0
      %452 = vmatpush.bf16.msra.mxu0 0
      %453 = vmatpush.bf16.msra.mxu0 %v426
      %454 = vmatpush.bf16.msra.mxu0 %v425
      %455 = vmatmul.bf16.gmra.mxu0 %v445
      %v456 = vpop.f32.mrf.mxu0
      %v457 = vadd.f32 %v432, %v456
      %v458 = vpop.f32.mrf.mxu0
      %v459 = vadd.f32 %v437, %v458
      %460 = vdwg.mxu0
      %v461 = vmul.f32 %v457, %v457
      %v462 = vmul.f32 %v459, %v459
      %v463 = vmul.f32 %v457, %v461
      %v464 = vmul.f32 %v459, %v462
      %v465 = vmul.f32 %v463, 0.044715
      %v466 = vmul.f32 %v464, 0.044715
      %v467 = vadd.f32 %v457, %v465
      %v468 = vadd.f32 %v459, %v466
      %v469 = vmul.f32 %v467, 0.7978846
      %v470 = vmul.f32 %v468, 0.7978846
      %v471 = vtanh.pop %v469
      %v472 = vtanh.pop %v470
      %v473 = vadd.f32 %v471, 1.0
      %v474 = vadd.f32 %v472, 1.0
      %v475 = vmul.f32 %v473, 0.5
      %v476 = vmul.f32 %v474, 0.5
      %v477 = vmul.f32 %v457, %v475
      %v478 = vmul.f32 %v459, %v476
      %vm479 = vcmask 31744
      %480 = vst.msk [vmem:[%s353] sm:$0xff] %vm479, %v477
      %481 = vst.msk [vmem:[%s353 + $0x8] sm:$0xff] %vm479, %v478
      %v482 = vsel %vm479, %v477, 0.0
      %v483 = vsel %vm479, %v478, 0.0
      %v484 = vadd.f32 %v482, %v483
      %v485 = vrot.slane %v484, 4
      %v486 = vadd.f32 %v484, %v485
      %v487 = vrot.slane %v486, 2
      %v488 = vadd.f32 %v486, %v487
      %v489 = vrot.slane %v488, 1
      %v490 = vadd.f32 %v488, %v489
      %v491 = vrcp.pop 16.0
      %v492 = vmul.f32 16.0, %v491
      %v493 = vsub.f32 1.0, %v492
      %v494 = vmul.f32 %v491, %v493
      %v495 = vadd.f32 %v491, %v494
      %vm496 = vweird.f32 %v491
      %v497 = vsel %vm496, %v491, %v495
      %v498 = vmul.f32 %v490, %v497
      %v499 = vmul.f32 %v477, %v477
      %v500 = vmul.f32 %v478, %v478
      %v501 = vsel %vm479, %v499, 0.0
      %v502 = vsel %vm479, %v500, 0.0
      %v503 = vadd.f32 %v501, %v502
      %v504 = vrot.slane %v503, 4
      %v505 = vadd.f32 %v503, %v504
      %v506 = vrot.slane %v505, 2
      %v507 = vadd.f32 %v505, %v506
      %v508 = vrot.slane %v507, 1
      %v509 = vadd.f32 %v507, %v508
      %v510 = vmul.f32 %v509, %v497
      %v511 = vmul.f32 %v498, %v498
      %v512 = vsub.f32 %v510, %v511
      %v513 = vsub.f32 %v477, %v498
      %v514 = vsub.f32 %v478, %v498
      %v515 = vadd.f32 %v512, 1e-05
      %v516 = vrsqrt.pop %v515
      %v517 = vmul.f32 %v516, %v515
      %v518 = vmul.f32 %v517, %v516
      %v519 = vmul.f32 0.5, %v518
      %v520 = vsub.f32 1.5, %v519
      %v521 = vmul.f32 %v516, %v520
      %vm522 = vweird.f32 %v515
      %vm523 = vweird.f32 %v516
      %vm524 = vmor %vm522, %vm523
      %v525 = vsel %vm524, %v516, %v521
      %v526 = vmul.f32 %v513, %v525
      %v527 = vmul.f32 %v514, %v525
      %v528 = vld [vmem:[%s5] sm:$0xff]
      %v529 = vld [vmem:[%s5 + $0x8] sm:$0xff]
      %531 = vset.pattern.permute.xlu0 0
      %532 = vperm.xlu0 %531, %v528
      %v533 = vpop.permute.xlu0 %532
      %536 = vset.pattern.permute.xlu0 0
      %537 = vperm.xlu0 %536, %v529
      %v538 = vpop.permute.xlu0 %537
      %v540 = vmul.f32 %v526, %v533
      %v541 = vmul.f32 %v527, %v538
      %542 = vset.pattern.permute.xlu0 1
      %543 = vperm.xlu0 %542, %v528
      %v544 = vpop.permute.xlu0 %543
      %546 = vset.pattern.permute.xlu0 1
      %547 = vperm.xlu0 %546, %v529
      %v548 = vpop.permute.xlu0 %547
      %v550 = vadd.f32 %v540, %v544
      %v551 = vadd.f32 %v541, %v548
      %552 = vst.msk [vmem:[%s361] sm:$0xff] %vm479, %v550
      %553 = vst.msk [vmem:[%s361 + $0x8] sm:$0xff] %vm479, %v551
      %p554 = scmp.lt.s32.totalorder %s23, 1
      %s555 = scalar_select %p554, %s23, 1
      %p556 = scmp.lt.s32.totalorder %s24, 0
      %s557 = scalar_select %p556, %s24, 0
      %s558 = smul.addr %s555, 2
      %s559 = sadd.s32 %s557, %s558
      %s560 = smul.addr %s559, 8
      %s561 = scalar_lea.vmem %s6, %s560
      %p562 = scmp.lt.s32.totalorder %s23, 1
      %s563 = scalar_select %p562, %s23, 1
      %p564 = scmp.lt.s32.totalorder %s24, 0
      %s565 = scalar_select %p564, %s24, 0
      %s566 = smul.addr %s563, 2
      %s567 = sadd.s32 %s565, %s566
      %s568 = smul.addr %s567, 8
      %s569 = scalar_lea.vmem %s7, %s568
      // Predicated region
      $region45: #{vis4mer_forward.5} parent=43 // pred_check
        %p570 = pneg %p191
      $region46: #{vis4mer_forward.5} parent=43 // pred_check_branch
        %572 = sbr.rel (%p570) target = $region48
      $region47: #{vis4mer_forward.5} parent=43 // pred_region
        _
      $region48: #{vis4mer_forward.5} parent=43 // pred_fallthru
        _
      // Predicated region
      $region49: #{vis4mer_forward.5} parent=43 // pred_check
        %p573 = pneg %p219
      $region50: #{vis4mer_forward.5} parent=43 // pred_check_branch
        %575 = sbr.rel (%p573) target = $region52
      $region51: #{vis4mer_forward.5} parent=43 // pred_region
        _
      $region52: #{vis4mer_forward.5} parent=43 // pred_fallthru
        _
    $region44: #{vis4mer_forward.5} parent=5 // pred_fallthru
      _
    %p576 = scmp.le.s32.totalorder 2, %s14
    // Predicated region
    $region53: #{vis4mer_forward.5} parent=5 // pred_check
      %p577 = pneg %p576
    $region54: #{vis4mer_forward.5} parent=5 // pred_check_branch
      %579 = sbr.rel (%p577) target = $region56
    $region55: #{vis4mer_forward.5} parent=5 // pred_region
      %s580 = ssub.s32 %s14, 2
      // Predicated region
      $region57: #{vis4mer_forward.5} parent=55 // pred_check
        %p581 = pneg %p197
      $region58: #{vis4mer_forward.5} parent=55 // pred_check_branch
        %583 = sbr.rel (%p581) target = $region60
      $region59: #{vis4mer_forward.5} parent=55 // pred_region
        %p584 = scmp.lt.s32.totalorder %s25, 1
        %s585 = scalar_select %p584, %s25, 1
        %p586 = scmp.lt.s32.totalorder %s26, 0
        %s587 = scalar_select %p586, %s26, 0
        %s588 = smul.addr %s585, 2
        %s589 = sadd.s32 %s587, %s588
        %s590 = smul.addr %s589, 8
        %s591 = scalar_lea.vmem %s6, %s590
      $region60: #{vis4mer_forward.5} parent=55 // pred_fallthru
        _
      // Predicated region
      $region61: #{vis4mer_forward.5} parent=55 // pred_check
        %p592 = pneg %p225
      $region62: #{vis4mer_forward.5} parent=55 // pred_check_branch
        %594 = sbr.rel (%p592) target = $region64
      $region63: #{vis4mer_forward.5} parent=55 // pred_region
        %p595 = scmp.lt.s32.totalorder %s25, 1
        %s596 = scalar_select %p595, %s25, 1
        %p597 = scmp.lt.s32.totalorder %s26, 0
        %s598 = scalar_select %p597, %s26, 0
        %s599 = smul.addr %s596, 2
        %s600 = sadd.s32 %s598, %s599
        %s601 = smul.addr %s600, 8
        %s602 = scalar_lea.vmem %s7, %s601
      $region64: #{vis4mer_forward.5} parent=55 // pred_fallthru
        _
    $region56: #{vis4mer_forward.5} parent=5 // pred_fallthru
      _
  $region6: #{vis4mer_forward.5} parent=0 // loop_footer
    %s18 = sadd.s32 1, %s14
  $region7: #{vis4mer_forward.5} parent=0 // loop_footer_branch
    %13 = sbr.rel target = $region3
  $region8: #{vis4mer_forward.5} parent=0 // loop_exit
    _

// kernel: vis4mer_forward.7
$region0: #{vis4mer_forward.7}
  #allocation0 [shape = 'u32[]', space=smem, size = 0x4, offset = 0x4, fixed_abs, tag = 'smem constant byte address 0x4 - core index']
  #allocation1 [shape = 'u32[72,128]{1,0:T(1,128)}', space=vmem, size = 0x9000, scoped, tag = 'internal scratch']
  %s0 = inlined_call_operand.vmem [shape: f32[2,8,2], index: 0, kind: input, shape index: {}]
  %s1 = inlined_call_operand.vmem [shape: bf16[8,10], index: 1, kind: input, shape index: {}]
  %s2 = inlined_call_operand.vmem [shape: f32[1,10], index: 2, kind: input, shape index: {}]
  %s3 = inlined_call_operand.hbm [shape: f32[2,10], index: 3, kind: output, shape index: {}]
  %s4 = sld [smem:[#allocation0]]
  $region22: #{vis4mer_forward.7} parent=0
    _
  %s6 = ssub.s32 1, %s4
  %s7 = scalar_select 0, %s6, %s4
  $region1: #{vis4mer_forward.7} parent=0
    #allocation2 [shape = 'u8[1024]{0}', space=vmem, size = 0x400, scoped, tag = 'output window, operand 0, single buffered']
    #allocation3 [shape = 's32[1]{0}', space=sflag, size = 0x4, scoped, tag = 'scoped memory for vis4mer_forward.7']
    %8 = vsyncpa [#allocation3], 0
    // Predicated region
    $region2: #{vis4mer_forward.7} parent=1 // pred_check
      _
    $region3: #{vis4mer_forward.7} parent=1 // pred_check_branch
      %10 = sbr.rel (0) target = $region5
    $region4: #{vis4mer_forward.7} parent=1 // pred_region
      _
    $region5: #{vis4mer_forward.7} parent=1 // pred_fallthru
      _
    // Predicated region
    $region6: #{vis4mer_forward.7} parent=1 // pred_check
      _
    $region7: #{vis4mer_forward.7} parent=1 // pred_check_branch
      %12 = sbr.rel (0) target = $region9
    $region8: #{vis4mer_forward.7} parent=1 // pred_region
      _
    $region9: #{vis4mer_forward.7} parent=1 // pred_fallthru
      _
    // Predicated region
    $region10: #{vis4mer_forward.7} parent=1 // pred_check
      _
    $region11: #{vis4mer_forward.7} parent=1 // pred_check_branch
      %14 = sbr.rel (0) target = $region13
    $region12: #{vis4mer_forward.7} parent=1 // pred_region
      _
    $region13: #{vis4mer_forward.7} parent=1 // pred_fallthru
      _
    %v16 = vld [vmem:[%s0] sm:$0xff]
    %v17 = vld [vmem:[%s0 + $0x8] sm:$0xff]
    %vm18 = vcmask 15360
    %v19 = vsel %vm18, %v16, 0.0
    %20 = vadd.xlane.f32.xlu0 %v19
    %v21 = vpop.xlane.xlu0 %20
    %v22 = vsel %vm18, %v17, 0.0
    %23 = vadd.xlane.f32.xlu0 %v22
    %v24 = vpop.xlane.xlu0 %23
    %v25 = vrcp.pop 2.0
    %v26 = vmul.f32 2.0, %v25
    %v27 = vsub.f32 1.0, %v26
    %v28 = vmul.f32 %v25, %v27
    %v29 = vadd.f32 %v25, %v28
    %vm30 = vweird.f32 %v25
    %v31 = vsel %vm30, %v25, %v29
    %v32 = vmul.f32 %v21, %v31
    %v33 = vmul.f32 %v24, %v31
    %v34 = vpack.c.bf16 %v32, %v32
    %v35 = vpack.c.bf16 %v33, %v33
    %v36 = vld [vmem:[%s1] sm:$0xf]
    %v37 = vld [vmem:[%s2] sm:$0x1]
    %v39 = vperm.slane %v37, 0
    %v43 = vunpack.c.l.b16 %v34
    %v44 = vunpack.c.l.b16 %v35
    %v45 = vlaneseq
    %v46 = vand.u32 %v45, 127
    %v47 = vperm.slane %v43, %v46
    %v48 = vperm.slane %v44, %v46
    %vm49 = vcmask 1041409
    %v50 = vsel %vm49, %v48, %v47
    %v51 = vpack.c.b16 %v50, %v50
    %vm52 = vcmask 64512
    %v54 = vsel %vm52, %v51, 0
    %vm56 = vcmask 1043456
    %v58 = vsel %vm56, %v36, 0
    %60 = vmatpush.bf16.msra.mxu0 0
    %61 = vmatpush.bf16.msra.mxu0 0
    %62 = vmatpush.bf16.msra.mxu0 0
    %63 = vmatpush.bf16.msra.mxu0 0
    %64 = vmatpush.bf16.msra.mxu0 0
    %65 = vmatpush.bf16.msra.mxu0 0
    %66 = vmatpush.bf16.msra.mxu0 0
    %67 = vmatpush.bf16.msra.mxu0 %v58
    %68 = vmatmul.bf16.gmra.mxu0 %v54
    %v69 = vpop.f32.mrf.mxu0
    %v70 = vadd.f32 %v39, %v69
    %v71 = vpop.f32.mrf.mxu0
    %72 = vdwg.mxu0
    %vm73 = vcmask 74752
    %74 = vst.msk [vmem:[#allocation2] sm:$0x3] %vm73, %v70
    // Predicated region
    $region14: #{vis4mer_forward.7} parent=1 // pred_check
      _
    $region15: #{vis4mer_forward.7} parent=1 // pred_check_branch
      %76 = sbr.rel (0) target = $region17
    $region16: #{vis4mer_forward.7} parent=1 // pred_region
      %78 = vsyncadd [#allocation3], 0
      %s80 = sshll.u32 [#allocation2], 4
      %s81 = int_to_ptr.vmem [resolvable:$true] %s80
      %s82 = sshll.u32 %s3, 4
      %s83 = int_to_ptr.hbm [resolvable:$true] %s82
      %85 = dma.vmem_to_hbm [thread:$0]  %s81, 32, %s83, [#allocation3]
    $region17: #{vis4mer_forward.7} parent=1 // pred_fallthru
      _
    // Predicated region
    $region18: #{vis4mer_forward.7} parent=1 // pred_check
      _
    $region19: #{vis4mer_forward.7} parent=1 // pred_check_branch
      %87 = sbr.rel (0) target = $region21
    $region20: #{vis4mer_forward.7} parent=1 // pred_region
      %89 = dma.done [#allocation3], 32
    $region21: #{vis4mer_forward.7} parent=1 // pred_fallthru
      _
    %90 = vsyncpa [#allocation3], 1

// kernel: vis4mer_forward.6
$region0: #{vis4mer_forward.6}
  #allocation0 [shape = 'u32[]', space=smem, size = 0x4, offset = 0x4, fixed_abs, tag = 'smem constant byte address 0x4 - core index']
  #allocation1 [shape = 'u32[72,128]{1,0:T(1,128)}', space=vmem, size = 0x9000, scoped, tag = 'internal scratch']
  %s0 = inlined_call_operand.vmem [shape: bf16[2,16,2], index: 0, kind: input, shape index: {}]
  %s1 = inlined_call_operand.vmem [shape: f32[2,16,2], index: 1, kind: input, shape index: {}]
  %s2 = inlined_call_operand.vmem [shape: bf16[16,16], index: 2, kind: input, shape index: {}]
  %s3 = inlined_call_operand.vmem [shape: bf16[8,16], index: 3, kind: input, shape index: {}]
  %s4 = inlined_call_operand.vmem [shape: f32[8,1], index: 4, kind: input, shape index: {}]
  %s5 = inlined_call_operand.vmem [shape: f32[2,8,2], index: 5, kind: output, shape index: {}]
  %s6 = sld [smem:[#allocation0]]
  $region53: #{vis4mer_forward.6} parent=0
    _
  %s8 = ssub.s32 1, %s6
  %s9 = scalar_select 0, %s8, %s6
  loop: start=0, step=1, limit=4
  $region2: #{vis4mer_forward.6} parent=0 // loop_pre_header
    _
  $region3: #{vis4mer_forward.6} parent=0 // loop_header
    %s11 = sphi 0, %s15
    %p12 = scmp.ge.s32.totalorder %s11, 4
    %s18 = sphi 0, %s30
    %s19 = sphi 0, %s26
    %s20 = sphi 0, %s18
    %s21 = sphi 0, %s19
    %s22 = sphi 0, %s20
    %s23 = sphi 0, %s21
    %s35 = sphi 0, %s37
    %s38 = sphi 0, %s35
    %s39 = sphi 0, %s38
    %s55 = sphi 0, %s39
    %s63 = sphi 0, %s65
    %s66 = sphi 0, %s63
    %s67 = sphi 0, %s66
    %s83 = sphi 0, %s67
    %s87 = sphi 0, %s87
    %s89 = sphi 0, %s87
    %s90 = sphi 0, %s89
    %s104 = sphi 0, %s90
    %s108 = sphi 0, %s108
    %s110 = sphi 0, %s108
    %s111 = sphi 0, %s110
    %s125 = sphi 0, %s111
    %s129 = sphi 0, %s129
    %s131 = sphi 0, %s129
    %s132 = sphi 0, %s131
    %s146 = sphi 0, %s132
    %s154 = sphi 0, %s156
    %s157 = sphi 0, %s154
    %s158 = sphi 0, %s157
    %s174 = sphi 0, %s158
  $region4: #{vis4mer_forward.6} parent=0 // loop_header_branch
    %14 = sbr.rel (%p12) target = $region8
  $region5: #{vis4mer_forward.6} parent=0 // loop_body
    %s16 = ssub.s32 %s11, 1
    %s17 = ssub.s32 %s11, 2
    %s24 = sadd.s32 1, %s19
    %p25 = scmp.ge.s32.totalorder %s24, 1
    %s26 = scalar_select %p25, 0, %s24
    %s27 = sadd.s32 1, %s18
    %s28 = scalar_select %p25, %s27, %s18
    %p29 = scmp.ge.s32.totalorder %s28, 2
    %s30 = scalar_select %p29, 0, %s28
    %s31 = ssub.s32 %s18, %s30
    %s32 = ssub.s32 %s19, %s26
    %s33 = sor.u32 %s31, %s32
    %p34 = scmp.eq.s32.totalorder %s33, 0
    %s36 = sadd.s32 %s35, 1
    %s37 = scalar_select %p34, %s35, %s36
    %p40 = pneg %p34
    %p41 = scmp.eq.s32.totalorder %s11, 1
    %p42 = por %p40, %p41
    %p43 = scmp.ne.s32.totalorder %s35, %s38
    %p44 = scmp.eq.s32.totalorder %s11, 0
    %p45 = por %p43, %p44
    %p46 = scmp.ne.s32.totalorder %s35, %s38
    %p47 = scmp.eq.s32.totalorder %s16, 1
    %p48 = por %p46, %p47
    %p49 = scmp.ne.s32.totalorder %s38, %s39
    %p50 = scmp.eq.s32.totalorder %s16, 0
    %p51 = por %p49, %p50
    %p52 = scmp.ne.s32.totalorder %s38, %s39
    %p53 = scmp.eq.s32.totalorder %s17, 1
    %p54 = por %p52, %p53
    %p56 = scmp.ne.s32.totalorder %s39, %s55
    %p57 = scmp.eq.s32.totalorder %s17, 0
    %p58 = por %p56, %p57
    %s59 = ssub.s32 %s18, %s30
    %s60 = ssub.s32 %s19, %s26
    %s61 = sor.u32 %s59, %s60
    %p62 = scmp.eq.s32.totalorder %s61, 0
    %s64 = sadd.s32 %s63, 1
    %s65 = scalar_select %p62, %s63, %s64
    %p68 = pneg %p62
    %p69 = scmp.eq.s32.totalorder %s11, 1
    %p70 = por %p68, %p69
    %p71 = scmp.ne.s32.totalorder %s63, %s66
    %p72 = scmp.eq.s32.totalorder %s11, 0
    %p73 = por %p71, %p72
    %p74 = scmp.ne.s32.totalorder %s63, %s66
    %p75 = scmp.eq.s32.totalorder %s16, 1
    %p76 = por %p74, %p75
    %p77 = scmp.ne.s32.totalorder %s66, %s67
    %p78 = scmp.eq.s32.totalorder %s16, 0
    %p79 = por %p77, %p78
    %p80 = scmp.ne.s32.totalorder %s66, %s67
    %p81 = scmp.eq.s32.totalorder %s17, 1
    %p82 = por %p80, %p81
    %p84 = scmp.ne.s32.totalorder %s67, %s83
    %p85 = scmp.eq.s32.totalorder %s17, 0
    %p86 = por %p84, %p85
    %s88 = sadd.s32 %s87, 1
    %p91 = scmp.eq.s32.totalorder %s11, 1
    %p92 = scmp.ne.s32.totalorder %s87, %s89
    %p93 = scmp.eq.s32.totalorder %s11, 0
    %p94 = por %p92, %p93
    %p95 = scmp.ne.s32.totalorder %s87, %s89
    %p96 = scmp.eq.s32.totalorder %s16, 1
    %p97 = por %p95, %p96
    %p98 = scmp.ne.s32.totalorder %s89, %s90
    %p99 = scmp.eq.s32.totalorder %s16, 0
    %p100 = por %p98, %p99
    %p101 = scmp.ne.s32.totalorder %s89, %s90
    %p102 = scmp.eq.s32.totalorder %s17, 1
    %p103 = por %p101, %p102
    %p105 = scmp.ne.s32.totalorder %s90, %s104
    %p106 = scmp.eq.s32.totalorder %s17, 0
    %p107 = por %p105, %p106
    %s109 = sadd.s32 %s108, 1
    %p112 = scmp.eq.s32.totalorder %s11, 1
    %p113 = scmp.ne.s32.totalorder %s108, %s110
    %p114 = scmp.eq.s32.totalorder %s11, 0
    %p115 = por %p113, %p114
    %p116 = scmp.ne.s32.totalorder %s108, %s110
    %p117 = scmp.eq.s32.totalorder %s16, 1
    %p118 = por %p116, %p117
    %p119 = scmp.ne.s32.totalorder %s110, %s111
    %p120 = scmp.eq.s32.totalorder %s16, 0
    %p121 = por %p119, %p120
    %p122 = scmp.ne.s32.totalorder %s110, %s111
    %p123 = scmp.eq.s32.totalorder %s17, 1
    %p124 = por %p122, %p123
    %p126 = scmp.ne.s32.totalorder %s111, %s125
    %p127 = scmp.eq.s32.totalorder %s17, 0
    %p128 = por %p126, %p127
    %s130 = sadd.s32 %s129, 1
    %p133 = scmp.eq.s32.totalorder %s11, 1
    %p134 = scmp.ne.s32.totalorder %s129, %s131
    %p135 = scmp.eq.s32.totalorder %s11, 0
    %p136 = por %p134, %p135
    %p137 = scmp.ne.s32.totalorder %s129, %s131
    %p138 = scmp.eq.s32.totalorder %s16, 1
    %p139 = por %p137, %p138
    %p140 = scmp.ne.s32.totalorder %s131, %s132
    %p141 = scmp.eq.s32.totalorder %s16, 0
    %p142 = por %p140, %p141
    %p143 = scmp.ne.s32.totalorder %s131, %s132
    %p144 = scmp.eq.s32.totalorder %s17, 1
    %p145 = por %p143, %p144
    %p147 = scmp.ne.s32.totalorder %s132, %s146
    %p148 = scmp.eq.s32.totalorder %s17, 0
    %p149 = por %p147, %p148
    %s150 = ssub.s32 %s18, %s30
    %s151 = ssub.s32 %s19, %s26
    %s152 = sor.u32 %s150, %s151
    %p153 = scmp.eq.s32.totalorder %s152, 0
    %s155 = sadd.s32 %s154, 1
    %s156 = scalar_select %p153, %s154, %s155
    %p159 = pneg %p153
    %p160 = scmp.eq.s32.totalorder %s11, 1
    %p161 = por %p159, %p160
    %p162 = scmp.ne.s32.totalorder %s154, %s157
    %p163 = scmp.eq.s32.totalorder %s11, 0
    %p164 = por %p162, %p163
    %p165 = scmp.ne.s32.totalorder %s154, %s157
    %p166 = scmp.eq.s32.totalorder %s16, 1
    %p167 = por %p165, %p166
    %p168 = scmp.ne.s32.totalorder %s157, %s158
    %p169 = scmp.eq.s32.totalorder %s16, 0
    %p170 = por %p168, %p169
    %p171 = scmp.ne.s32.totalorder %s157, %s158
    %p172 = scmp.eq.s32.totalorder %s17, 1
    %p173 = por %p171, %p172
    %p175 = scmp.ne.s32.totalorder %s158, %s174
    %p176 = scmp.eq.s32.totalorder %s17, 0
    %p177 = por %p175, %p176
    %p178 = scmp.le.s32.totalorder 1, %s11
    %p179 = scmp.lt.s32.totalorder %s11, 3
    %p180 = pnand %p178, %p179
    %p181 = pneg %p180
    // Predicated region
    $region9: #{vis4mer_forward.6} parent=5 // pred_check
      _
    $region10: #{vis4mer_forward.6} parent=5 // pred_check_branch
      %183 = sbr.rel (%p180) target = $region12
    $region11: #{vis4mer_forward.6} parent=5 // pred_region
      %s184 = ssub.s32 %s11, 1
      // Predicated region
      $region13: #{vis4mer_forward.6} parent=11 // pred_check
        %p185 = pneg %p100
      $region14: #{vis4mer_forward.6} parent=11 // pred_check_branch
        %187 = sbr.rel (%p185) target = $region16
      $region15: #{vis4mer_forward.6} parent=11 // pred_region
        _
      $region16: #{vis4mer_forward.6} parent=11 // pred_fallthru
        _
      // Predicated region
      $region17: #{vis4mer_forward.6} parent=11 // pred_check
        %p188 = pneg %p121
      $region18: #{vis4mer_forward.6} parent=11 // pred_check_branch
        %190 = sbr.rel (%p188) target = $region20
      $region19: #{vis4mer_forward.6} parent=11 // pred_region
        _
      $region20: #{vis4mer_forward.6} parent=11 // pred_fallthru
        _
      // Predicated region
      $region21: #{vis4mer_forward.6} parent=11 // pred_check
        %p191 = pneg %p142
      $region22: #{vis4mer_forward.6} parent=11 // pred_check_branch
        %193 = sbr.rel (%p191) target = $region24
      $region23: #{vis4mer_forward.6} parent=11 // pred_region
        _
      $region24: #{vis4mer_forward.6} parent=11 // pred_fallthru
        _
    $region12: #{vis4mer_forward.6} parent=5 // pred_fallthru
      _
    %p194 = scmp.lt.s32.totalorder %s11, 2
    // Predicated region
    $region25: #{vis4mer_forward.6} parent=5 // pred_check
      %p195 = pneg %p194
    $region26: #{vis4mer_forward.6} parent=5 // pred_check_branch
      %197 = sbr.rel (%p195) target = $region28
    $region27: #{vis4mer_forward.6} parent=5 // pred_region
      // Predicated region
      $region29: #{vis4mer_forward.6} parent=27 // pred_check
        %p198 = pneg %p45
      $region30: #{vis4mer_forward.6} parent=27 // pred_check_branch
        %200 = sbr.rel (%p198) target = $region32
      $region31: #{vis4mer_forward.6} parent=27 // pred_region
        %p201 = scmp.lt.s32.totalorder %s18, 1
        %s202 = scalar_select %p201, %s18, 1
        %p203 = scmp.lt.s32.totalorder %s19, 0
        %s204 = scalar_select %p203, %s19, 0
        %s205 = smul.addr %s202, 2
        %s206 = sadd.s32 %s204, %s205
        %s207 = smul.addr %s206, 4
        %s208 = scalar_lea.vmem %s0, %s207
      $region32: #{vis4mer_forward.6} parent=27 // pred_fallthru
        _
      // Predicated region
      $region33: #{vis4mer_forward.6} parent=27 // pred_check
        %p209 = pneg %p73
      $region34: #{vis4mer_forward.6} parent=27 // pred_check_branch
        %211 = sbr.rel (%p209) target = $region36
      $region35: #{vis4mer_forward.6} parent=27 // pred_region
        %p212 = scmp.lt.s32.totalorder %s18, 1
        %s213 = scalar_select %p212, %s18, 1
        %p214 = scmp.lt.s32.totalorder %s19, 0
        %s215 = scalar_select %p214, %s19, 0
        %s216 = smul.addr %s213, 2
        %s217 = sadd.s32 %s215, %s216
        %s218 = smul.addr %s217, 8
        %s219 = scalar_lea.vmem %s1, %s218
      $region36: #{vis4mer_forward.6} parent=27 // pred_fallthru
        _
    $region28: #{vis4mer_forward.6} parent=5 // pred_fallthru
      _
    %p220 = scmp.le.s32.totalorder 1, %s11
    %p221 = scmp.lt.s32.totalorder %s11, 3
    %p222 = pnand %p220, %p221
    %p223 = pneg %p222
    // Predicated region
    $region37: #{vis4mer_forward.6} parent=5 // pred_check
      _
    $region38: #{vis4mer_forward.6} parent=5 // pred_check_branch
      %225 = sbr.rel (%p222) target = $region40
    $region39: #{vis4mer_forward.6} parent=5 // pred_region
      %s226 = ssub.s32 %s11, 1
      %p227 = scmp.lt.s32.totalorder %s20, 1
      %s228 = scalar_select %p227, %s20, 1
      %p229 = scmp.lt.s32.totalorder %s21, 0
      %s230 = scalar_select %p229, %s21, 0
      %s231 = smul.addr %s228, 2
      %s232 = sadd.s32 %s230, %s231
      %s233 = smul.addr %s232, 4
      %s234 = scalar_lea.vmem %s0, %s233
      %p235 = pneg %p51
      %p236 = pneg %p48
      %p237 = scmp.lt.s32.totalorder %s20, 1
      %s238 = scalar_select %p237, %s20, 1
      %p239 = scmp.lt.s32.totalorder %s21, 0
      %s240 = scalar_select %p239, %s21, 0
      %s241 = smul.addr %s238, 2
      %s242 = sadd.s32 %s240, %s241
      %s243 = smul.addr %s242, 8
      %s244 = scalar_lea.vmem %s1, %s243
      %p245 = pneg %p79
      %p246 = pneg %p76
      %p247 = pneg %p100
      %p248 = pneg %p97
      %p249 = pneg %p121
      %p250 = pneg %p118
      %p251 = pneg %p142
      %p252 = pneg %p139
      %p253 = pneg %p170
      %p254 = pneg %p167
      %p255 = scmp.lt.s32.totalorder %s20, 1
      %s256 = scalar_select %p255, %s20, 1
      %p257 = scmp.lt.s32.totalorder %s21, 0
      %s258 = scalar_select %p257, %s21, 0
      %s259 = sadd.s32 %s258, %s256
      %s260 = smul.addr %s259, 8
      %s261 = scalar_lea.vmem %s5, %s260
      %p262 = scmp.lt.s32.totalorder %s20, 1
      %s263 = scalar_select %p262, %s20, 1
      %p264 = scmp.lt.s32.totalorder %s21, 0
      %s265 = scalar_select %p264, %s21, 0
      %s266 = smul.addr %s263, 2
      %s267 = sadd.s32 %s265, %s266
      %s268 = smul.addr %s267, 4
      %s269 = scalar_lea.vmem %s0, %s268
      %p270 = scmp.lt.s32.totalorder %s20, 1
      %s271 = scalar_select %p270, %s20, 1
      %p272 = scmp.lt.s32.totalorder %s21, 0
      %s273 = scalar_select %p272, %s21, 0
      %s274 = smul.addr %s271, 2
      %s275 = sadd.s32 %s273, %s274
      %s276 = smul.addr %s275, 8
      %s277 = scalar_lea.vmem %s1, %s276
      %p278 = scmp.lt.s32.totalorder %s20, 1
      %s279 = scalar_select %p278, %s20, 1
      %p280 = scmp.lt.s32.totalorder %s21, 0
      %s281 = scalar_select %p280, %s21, 0
      %s282 = sadd.s32 %s281, %s279
      %s283 = smul.addr %s282, 8
      %s284 = scalar_lea.vmem %s5, %s283
      %v286 = vld [vmem:[%s2] sm:$0xf]
      %v287 = vld [vmem:[%s2 + $0x4] sm:$0xf]
      %v288 = vld [vmem:[%s269] sm:$0xf]
      %v289 = vld [vmem:[%s269 + $0x4] sm:$0xf]
      %v290 = vld [vmem:[%s277] sm:$0xff]
      %v291 = vld [vmem:[%s277 + $0x8] sm:$0xff]
      %v294 = vunpack.c.l.b16 %v286
      %v295 = vunpack.c.l.b16 %v287
      %v296 = vpack.c.b16 %v295, %v294
      %v299 = vunpack.c.l.b16 %v288
      %v300 = vunpack.c.l.b16 %v289
      %v301 = vpack.c.b16 %v300, %v299
      %vm303 = vcmask 130048
      %v305 = vsel %vm303, %v296, 0
      %307 = vmatpush.bf16.msra.mxu0 0
      %308 = vmatpush.bf16.msra.mxu0 0
      %309 = vmatpush.bf16.msra.mxu0 0
      %310 = vmatpush.bf16.msra.mxu0 0
      %311 = vmatpush.bf16.msra.mxu0 0
      %312 = vmatpush.bf16.msra.mxu0 0
      %313 = vmatpush.bf16.msra.mxu0 0
      %314 = vmatpush.bf16.msra.mxu0 %v301
      %315 = vmatmul.bf16.gmra.mxu0 %v305
      %v316 = vpop.f32.mrf.mxu0
      %v317 = vadd.f32 %v290, %v316
      %v318 = vpop.f32.mrf.mxu0
      %v319 = vadd.f32 %v291, %v318
      %320 = vdwg.mxu0
      %v321 = vld [vmem:[%s3] sm:$0xf]
      %v322 = vpack.c.bf16 %v319, %v317
      %v323 = vld [vmem:[%s4] sm:$0xff]
      %325 = vset.pattern.permute.xlu0 0
      %326 = vperm.xlu0 %325, %v323
      %v327 = vpop.permute.xlu0 %326
      %v330 = vsel %vm303, %v321, 0
      %332 = vmatpush.bf16.msra.mxu0 0
      %333 = vmatpush.bf16.msra.mxu0 0
      %334 = vmatpush.bf16.msra.mxu0 0
      %335 = vmatpush.bf16.msra.mxu0 0
      %336 = vmatpush.bf16.msra.mxu0 0
      %337 = vmatpush.bf16.msra.mxu0 0
      %338 = vmatpush.bf16.msra.mxu0 0
      %339 = vmatpush.bf16.msra.mxu0 %v322
      %340 = vmatmul.bf16.gmra.mxu0 %v330
      %v341 = vpop.f32.mrf.mxu0
      %v342 = vadd.f32 %v327, %v341
      %v343 = vpop.f32.mrf.mxu0
      %344 = vdwg.mxu0
      %v345 = vmul.f32 %v342, %v342
      %v346 = vmul.f32 %v342, %v345
      %v347 = vmul.f32 %v346, 0.044715
      %v348 = vadd.f32 %v342, %v347
      %v349 = vmul.f32 %v348, 0.7978846
      %v350 = vtanh.pop %v349
      %v351 = vadd.f32 %v350, 1.0
      %v352 = vmul.f32 %v351, 0.5
      %v353 = vmul.f32 %v342, %v352
      %vm354 = vcmask 15360
      %355 = vst.msk [vmem:[%s284] sm:$0xff] %vm354, %v353
      %p356 = scmp.lt.s32.totalorder %s20, 1
      %s357 = scalar_select %p356, %s20, 1
      %p358 = scmp.lt.s32.totalorder %s21, 0
      %s359 = scalar_select %p358, %s21, 0
      %s360 = sadd.s32 %s359, %s357
      %s361 = smul.addr %s360, 8
      %s362 = scalar_lea.vmem %s5, %s361
      // Predicated region
      $region41: #{vis4mer_forward.6} parent=39 // pred_check
        %p363 = pneg %p167
      $region42: #{vis4mer_forward.6} parent=39 // pred_check_branch
        %365 = sbr.rel (%p363) target = $region44
      $region43: #{vis4mer_forward.6} parent=39 // pred_region
        _
      $region44: #{vis4mer_forward.6} parent=39 // pred_fallthru
        _
    $region40: #{vis4mer_forward.6} parent=5 // pred_fallthru
      _
    %p366 = scmp.le.s32.totalorder 2, %s11
    // Predicated region
    $region45: #{vis4mer_forward.6} parent=5 // pred_check
      %p367 = pneg %p366
    $region46: #{vis4mer_forward.6} parent=5 // pred_check_branch
      %369 = sbr.rel (%p367) target = $region48
    $region47: #{vis4mer_forward.6} parent=5 // pred_region
      %s370 = ssub.s32 %s11, 2
      // Predicated region
      $region49: #{vis4mer_forward.6} parent=47 // pred_check
        %p371 = pneg %p173
      $region50: #{vis4mer_forward.6} parent=47 // pred_check_branch
        %373 = sbr.rel (%p371) target = $region52
      $region51: #{vis4mer_forward.6} parent=47 // pred_region
        %p374 = scmp.lt.s32.totalorder %s22, 1
        %s375 = scalar_select %p374, %s22, 1
        %p376 = scmp.lt.s32.totalorder %s23, 0
        %s377 = scalar_select %p376, %s23, 0
        %s378 = sadd.s32 %s377, %s375
        %s379 = smul.addr %s378, 8
        %s380 = scalar_lea.vmem %s5, %s379
      $region52: #{vis4mer_forward.6} parent=47 // pred_fallthru
        _
    $region48: #{vis4mer_forward.6} parent=5 // pred_fallthru
      _
  $region6: #{vis4mer_forward.6} parent=0 // loop_footer
    %s15 = sadd.s32 1, %s11
  $region7: #{vis4mer_forward.6} parent=0 // loop_footer_branch
    %10 = sbr.rel target = $region3
  $region8: #{vis4mer_forward.6} parent=0 // loop_exit
    _

</llo_original>
